<compile_context>
chip_gen: v7x
topology: tpu7x:2x2x1
jax: 0.10.0
libtpu: 0.0.40
codegen_flags: <defaults>
</compile_context>

<pallas_src>
import functools

import jax
import jax.numpy as jnp
from jax.experimental import pallas as pl
from jax.experimental.pallas import tpu as pltpu


def _round_up(x: int, m: int) -> int:
    return ((x + m - 1) // m) * m


# ----------------------------- Pallas kernel --------------------------------
def _tcn_kernel(xl_ref, xc_ref, xr_ref,
                w_in_ref, b_in_ref,
                w_prev_ref, w_ctr_ref, w_next_ref, b_dil_ref,
                w_pw_ref, b_pw_ref,
                w_out_ref, b_out_ref,
                o_ref,
                hpad_ref,
                *, n_layers, t_tile, halo, lpad, seq_len):
    bf = jnp.bfloat16
    f32 = jnp.float32
    win = t_tile + 2 * halo                       # working-window width

    # --- halo'd input window (C_in, win); in-kernel bf16 cast of x -----------
    xl = xl_ref[0]                                # (C_in, t_tile) f32
    xc = xc_ref[0]
    xr = xr_ref[0]
    x_win = jnp.concatenate(
        [xl[:, t_tile - halo:], xc, xr[:, :halo]], axis=-1).astype(bf)

    # conv_in : 1x1 conv == (F, C_in) @ (C_in, win); f32 accumulate + f32 bias.
    h = jnp.dot(w_in_ref[...], x_win,
                preferred_element_type=f32) + b_in_ref[...]        # (F, win)
    F = h.shape[0]

    # Global time-validity mask: window column t maps to global time
    # j*t_tile - halo + t; anything outside [0, seq_len) must act as a zero tap
    # (exact Conv1d zero padding; also kills clamped-neighbor / padded columns).
    g = (jax.lax.broadcasted_iota(jnp.int32, (F, win), 1)
         + (pl.program_id(1) * t_tile - halo))
    valid = jnp.logical_and(g >= 0, g < seq_len)

    # Zero the shifted-tap scratch once per grid step (its frame must stay 0).
    hpad_ref[...] = jnp.zeros(hpad_ref.shape, dtype=hpad_ref.dtype)

    for l in range(n_layers):                     # static unroll, n_layers small
        d = 2 ** l                                # dilation
        # bf16 tap operand; invalid (out-of-sequence) columns forced to zero.
        h_bf = jnp.where(valid, h, 0.0).astype(bf)                 # (F, win)
        hpad_ref[:, lpad:lpad + win] = h_bf
        h_prev = hpad_ref[:, lpad - d:lpad - d + win]              # h[t-d], 0 pad
        h_next = hpad_ref[:, lpad + d:lpad + d + win]              # h[t+d], 0 pad

        # Dilated 3-tap conv: three accumulating K=F MXU dots (no taps concat).
        conv = jnp.dot(w_prev_ref[l], h_prev, preferred_element_type=f32)
        conv = conv + jnp.dot(w_ctr_ref[l], h_bf, preferred_element_type=f32)
        conv = conv + jnp.dot(w_next_ref[l], h_next, preferred_element_type=f32)
        conv = conv + b_dil_ref[l]

        act = jnp.maximum(conv, 0.0)                               # ReLU (f32)

        pw = jnp.dot(w_pw_ref[l], act.astype(bf),
                     preferred_element_type=f32) + b_pw_ref[l]
        # Dropout -> identity (eval mode); residual add stays f32.
        h = h + pw

    # conv_out on this tile's own t_tile columns only (halo dropped);
    # lane-dense (n_classes, t_tile) store.
    h_c = h[:, halo:halo + t_tile].astype(bf)
    o_ref[0] = (jnp.dot(w_out_ref[...], h_c, preferred_element_type=f32)
                + b_out_ref[...]).astype(o_ref.dtype)


# ------------------------------ wrapper --------------------------------------
def single_stage_tcn(x_ncw, params, *, t_tile=None):
    """x_ncw: (N, C_in, T) float32  ->  (N, n_classes, T) float32."""
    (w_in, b_in, w_dil, b_dil, w_pw, b_pw, w_out, b_out) = params
    N, C_in, T = x_ncw.shape
    F = w_in.shape[0]
    L = w_dil.shape[0]
    n_classes = w_out.shape[0]
    bf = jnp.bfloat16

    halo = 2 ** L - 1                       # receptive-field half-width
    d_max = 2 ** (L - 1)
    if t_tile is None:
        # TODO(synk): size per generation (v7x: keep live (F, t_tile) temporaries
        # + double-buffered blocks well under ~48 MiB of VMEM).
        t_tile = max(128, min(1024, _round_up(T, 128)))
    assert t_tile % 128 == 0, "t_tile must be a multiple of 128 (lane width)"
    # TODO(synk): support halos wider than one tile for very deep TCNs.
    assert halo <= t_tile, "halo (2^L - 1) must fit within one neighbor tile"

    t_pad = _round_up(T, t_tile)
    num_tiles = t_pad // t_tile
    # Pad only when T is not a tile multiple (small one-time pass over x).
    x_p = x_ncw if t_pad == T else jnp.pad(
        x_ncw, ((0, 0), (0, 0), (0, t_pad - T)))

    # One-time bf16 weight casts; biases stay f32, shaped (C, 1) so they
    # broadcast along the lane (time) axis.
    w_in_b = w_in.astype(bf)
    w_prev_b = w_dil[..., 0].astype(bf)     # tap at t - d   (Conv1d k=0)
    w_ctr_b = w_dil[..., 1].astype(bf)      # tap at t       (Conv1d k=1)
    w_next_b = w_dil[..., 2].astype(bf)     # tap at t + d   (Conv1d k=2)
    w_pw_b = w_pw.astype(bf)
    w_out_b = w_out.astype(bf)
    b_in_k = b_in.reshape(F, 1)
    b_dil_k = b_dil.reshape(L, F, 1)
    b_pw_k = b_pw.reshape(L, F, 1)
    b_out_k = b_out.reshape(n_classes, 1)

    lpad = max(128, _round_up(d_max, 128))  # lane-aligned center writes
    win = t_tile + 2 * halo

    kernel = functools.partial(_tcn_kernel, n_layers=L, t_tile=t_tile,
                               halo=halo, lpad=lpad, seq_len=T)

    # VMEM limit from the chip's actual capacity (~48 MiB v7x, ~96 MiB v5e/v6e).
    try:
        vmem_cap = int(getattr(pltpu.get_tpu_info(), "vmem_capacity_bytes",
                               64 * 1024 * 1024))
    except Exception:
        vmem_cap = 64 * 1024 * 1024
    vmem_limit = max(32 * 1024 * 1024,
                     min((vmem_cap * 3) // 4, 100 * 1024 * 1024))

    flops = 2 * N * num_tiles * (win * F * (C_in + 4 * L * F)
                                 + t_tile * F * n_classes)
    weight_bytes = sum(int(a.size) * a.dtype.itemsize
                       for a in (w_in_b, w_prev_b, w_ctr_b, w_next_b, w_pw_b,
                                 w_out_b, b_in_k, b_dil_k, b_pw_k, b_out_k))
    bytes_accessed = (3 * int(x_p.size) * x_p.dtype.itemsize
                      + weight_bytes + N * n_classes * t_pad * 4)

    center = lambda b, j: (b, 0, j)
    left = lambda b, j: (b, 0, jnp.maximum(j - 1, 0))
    right = lambda b, j: (b, 0, jnp.minimum(j + 1, num_tiles - 1))
    const2 = lambda b, j: (0, 0)
    const3 = lambda b, j: (0, 0, 0)

    out = pl.pallas_call(
        kernel,
        out_shape=jax.ShapeDtypeStruct((N, n_classes, t_pad), jnp.float32),
        grid_spec=pltpu.PrefetchScalarGridSpec(
            num_scalar_prefetch=0,
            grid=(N, num_tiles),
            in_specs=[
                pl.BlockSpec((1, C_in, t_tile), left),    # x: left neighbor tile
                pl.BlockSpec((1, C_in, t_tile), center),  # x: this tile
                pl.BlockSpec((1, C_in, t_tile), right),   # x: right neighbor tile
                pl.BlockSpec((F, C_in), const2),          # w_in
                pl.BlockSpec((F, 1), const2),             # b_in
                pl.BlockSpec((L, F, F), const3),          # w_dil tap t-d
                pl.BlockSpec((L, F, F), const3),          # w_dil tap t
                pl.BlockSpec((L, F, F), const3),          # w_dil tap t+d
                pl.BlockSpec((L, F, 1), const3),          # b_dil
                pl.BlockSpec((L, F, F), const3),          # w_pw
                pl.BlockSpec((L, F, 1), const3),          # b_pw
                pl.BlockSpec((n_classes, F), const2),     # w_out
                pl.BlockSpec((n_classes, 1), const2),     # b_out
            ],
            out_specs=pl.BlockSpec((1, n_classes, t_tile), center),
            scratch_shapes=[pltpu.VMEM((F, lpad + win + d_max), bf)],
        ),
        compiler_params=pltpu.CompilerParams(
            dimension_semantics=("parallel", "parallel"),
            vmem_limit_bytes=vmem_limit),
        cost_estimate=pl.CostEstimate(flops=flops, transcendentals=0,
                                      bytes_accessed=bytes_accessed),
    )(x_p, x_p, x_p,
      w_in_b, b_in_k,
      w_prev_b, w_ctr_b, w_next_b, b_dil_k,
      w_pw_b, b_pw_k,
      w_out_b, b_out_k)

    return out if t_pad == T else out[:, :, :T]


# -------------------------- pure-JAX reference --------------------------------
def ref_forward(x_ncw, params):
    """Reference in NCW, mirroring the kernel's bf16-operand / f32-accumulate mix."""
    (w_in, b_in, w_dil, b_dil, w_pw, b_pw, w_out, b_out) = params
    bf = jnp.bfloat16
    L = w_dil.shape[0]

    def conv1x1(w, xin):   # (O, C) x (N, C, T) -> (N, O, T), f32 accumulate
        return jnp.einsum('oc,nct->not', w.astype(bf), xin.astype(bf),
                          preferred_element_type=jnp.float32)

    h = conv1x1(w_in, x_ncw) + b_in[None, :, None]
    T = h.shape[-1]
    for l in range(L):
        d = 2 ** l
        hp = jnp.pad(h, ((0, 0), (0, 0), (d, d)))
        conv = (conv1x1(w_dil[l, :, :, 0], hp[:, :, 0:T])
                + conv1x1(w_dil[l, :, :, 1], hp[:, :, d:d + T])
                + conv1x1(w_dil[l, :, :, 2], hp[:, :, 2 * d:2 * d + T])
                + b_dil[l][None, :, None])
        act = jnp.maximum(conv, 0.0)
        pw = conv1x1(w_pw[l], act) + b_pw[l][None, :, None]
        h = h + pw
    return conv1x1(w_out, h) + b_out[None, :, None]


# -------------------------------- main ----------------------------------------
if __name__ == "__main__":
    # Small shapes; T is deliberately not a multiple of the tile so the halo'd
    # multi-tile path, edge clamping and validity masking are all exercised.
    N, C_in, T = 2, 4, 200
    F, n_classes, n_layers = 32, 8, 3

    key = jax.random.PRNGKey(0)
    ks = jax.random.split(key, 9)

    # PyTorch-like layouts: 1x1 conv weight (C_out, C_in); dilated conv weight
    # (layer, C_out, C_in, 3) where tap k is time offset (k - 1) * dilation.
    scale = 0.1
    w_in = scale * jax.random.normal(ks[0], (F, C_in), jnp.float32)
    b_in = scale * jax.random.normal(ks[1], (F,), jnp.float32)
    w_dil = scale * jax.random.normal(ks[2], (n_layers, F, F, 3), jnp.float32)
    b_dil = scale * jax.random.normal(ks[3], (n_layers, F), jnp.float32)
    w_pw = scale * jax.random.normal(ks[4], (n_layers, F, F), jnp.float32)
    b_pw = scale * jax.random.normal(ks[5], (n_layers, F), jnp.float32)
    w_out = scale * jax.random.normal(ks[6], (n_classes, F), jnp.float32)
    b_out = scale * jax.random.normal(ks[7], (n_classes,), jnp.float32)
    params = (w_in, b_in, w_dil, b_dil, w_pw, b_pw, w_out, b_out)

    x = jax.random.normal(ks[8], (N, C_in, T), jnp.float32)    # NCW, like PyTorch

    out = jax.block_until_ready(single_stage_tcn(x, params, t_tile=128))
    ref = jax.block_until_ready(ref_forward(x, params))

    assert out.shape == (N, n_classes, T), out.shape
    err = float(jnp.max(jnp.abs(out - ref)))
    assert err < 2e-3, err
    print("KERNEL_OK")
</pallas_src>

<mosaic_0001>
module attributes {stable_mosaic.version = 11 : i64} {
  func.func @_tcn_kernel(%arg0: i32, %arg1: i32, %arg2: memref<1x4x128xf32, #tpu.memory_space<vmem>>, %arg3: memref<1x4x128xf32, #tpu.memory_space<vmem>>, %arg4: memref<1x4x128xf32, #tpu.memory_space<vmem>>, %arg5: memref<32x4xbf16, #tpu.memory_space<vmem>>, %arg6: memref<32x1xf32, #tpu.memory_space<vmem>>, %arg7: memref<3x32x32xbf16, #tpu.memory_space<vmem>>, %arg8: memref<3x32x32xbf16, #tpu.memory_space<vmem>>, %arg9: memref<3x32x32xbf16, #tpu.memory_space<vmem>>, %arg10: memref<3x32x1xf32, #tpu.memory_space<vmem>>, %arg11: memref<3x32x32xbf16, #tpu.memory_space<vmem>>, %arg12: memref<3x32x1xf32, #tpu.memory_space<vmem>>, %arg13: memref<8x32xbf16, #tpu.memory_space<vmem>>, %arg14: memref<8x1xf32, #tpu.memory_space<vmem>>, %arg15: memref<1x8x128xf32, #tpu.memory_space<vmem>>, %arg16: memref<32x274xbf16, #tpu.memory_space<vmem>>) attributes {dimension_semantics = [#tpu.dimension_semantics<parallel>, #tpu.dimension_semantics<parallel>], iteration_bounds = array<i64: 2, 2>, scalar_prefetch = 0 : i64, scratch_operands = 1 : i64, tpu.core_type = #tpu.core_type<tc>, window_params = [{transform_indices = @transform_0, window_bounds = array<i64: 1, 4, 128>}, {transform_indices = @transform_1, window_bounds = array<i64: 1, 4, 128>}, {transform_indices = @transform_2, window_bounds = array<i64: 1, 4, 128>}, {pipeline_mode = #tpu.pipeline_mode<synchronous>, transform_indices = @transform_3, window_bounds = array<i64: 32, 4>}, {pipeline_mode = #tpu.pipeline_mode<synchronous>, transform_indices = @transform_4, window_bounds = array<i64: 32, 1>}, {pipeline_mode = #tpu.pipeline_mode<synchronous>, transform_indices = @transform_5, window_bounds = array<i64: 3, 32, 32>}, {pipeline_mode = #tpu.pipeline_mode<synchronous>, transform_indices = @transform_6, window_bounds = array<i64: 3, 32, 32>}, {pipeline_mode = #tpu.pipeline_mode<synchronous>, transform_indices = @transform_7, window_bounds = array<i64: 3, 32, 32>}, {pipeline_mode = #tpu.pipeline_mode<synchronous>, transform_indices = @transform_8, window_bounds = array<i64: 3, 32, 1>}, {pipeline_mode = #tpu.pipeline_mode<synchronous>, transform_indices = @transform_9, window_bounds = array<i64: 3, 32, 32>}, {pipeline_mode = #tpu.pipeline_mode<synchronous>, transform_indices = @transform_10, window_bounds = array<i64: 3, 32, 1>}, {pipeline_mode = #tpu.pipeline_mode<synchronous>, transform_indices = @transform_11, window_bounds = array<i64: 8, 32>}, {pipeline_mode = #tpu.pipeline_mode<synchronous>, transform_indices = @transform_12, window_bounds = array<i64: 8, 1>}, {transform_indices = @transform_13, window_bounds = array<i64: 1, 8, 128>}]} {
    %c0 = arith.constant 0 : index
    %c0_0 = arith.constant 0 : index
    %c0_1 = arith.constant 0 : index
    %0 = vector.load %arg2[%c0, %c0_0, %c0_1] : memref<1x4x128xf32, #tpu.memory_space<vmem>>, vector<1x4x128xf32>
    %1 = vector.shape_cast %0 : vector<1x4x128xf32> to vector<4x128xf32>
    %c0_2 = arith.constant 0 : index
    %c0_3 = arith.constant 0 : index
    %c0_4 = arith.constant 0 : index
    %2 = vector.load %arg3[%c0_2, %c0_3, %c0_4] : memref<1x4x128xf32, #tpu.memory_space<vmem>>, vector<1x4x128xf32>
    %3 = vector.shape_cast %2 : vector<1x4x128xf32> to vector<4x128xf32>
    %c0_5 = arith.constant 0 : index
    %c0_6 = arith.constant 0 : index
    %c0_7 = arith.constant 0 : index
    %4 = vector.load %arg4[%c0_5, %c0_6, %c0_7] : memref<1x4x128xf32, #tpu.memory_space<vmem>>, vector<1x4x128xf32>
    %5 = vector.shape_cast %4 : vector<1x4x128xf32> to vector<4x128xf32>
    %6 = vector.extract_strided_slice %1 {offsets = [0, 121], sizes = [4, 7], strides = [1, 1]} : vector<4x128xf32> to vector<4x7xf32>
    %7 = vector.extract_strided_slice %5 {offsets = [0, 0], sizes = [4, 7], strides = [1, 1]} : vector<4x128xf32> to vector<4x7xf32>
    %8 = tpu.concatenate %6, %3, %7 in 1 : vector<4x7xf32>, vector<4x128xf32>, vector<4x7xf32> -> vector<4x142xf32>
    %9 = arith.truncf %8 : vector<4x142xf32> to vector<4x142xbf16>
    %c0_8 = arith.constant 0 : index
    %c0_9 = arith.constant 0 : index
    %10 = vector.load %arg5[%c0_8, %c0_9] : memref<32x4xbf16, #tpu.memory_space<vmem>>, vector<32x4xbf16>
    %cst = arith.constant dense<0.000000e+00> : vector<32x142xf32>
    %11 = tpu.matmul %10, %9, %cst {dimension_numbers = #tpu.dot_dimension_numbers<[1], [0], [0], [1], [0, 0, 1, 1], [], []>} : vector<32x4xbf16>, vector<4x142xbf16>, vector<32x142xf32> -> vector<32x142xf32>
    %c0_10 = arith.constant 0 : index
    %c0_11 = arith.constant 0 : index
    %12 = vector.load %arg6[%c0_10, %c0_11] : memref<32x1xf32, #tpu.memory_space<vmem>>, vector<32x1xf32>
    %13 = vector.broadcast %12 : vector<32x1xf32> to vector<32x142xf32>
    %14 = arith.addf %11, %13 : vector<32x142xf32>
    %15 = tpu.iota {dimensions = array<i32: 1>} : vector<32x142xi32>
    %c128_i32 = arith.constant 128 : i32
    %16 = arith.muli %arg1, %c128_i32 : i32
    %c7_i32 = arith.constant 7 : i32
    %17 = arith.subi %16, %c7_i32 : i32
    %18 = vector.broadcast %17 : i32 to vector<32x142xi32>
    %19 = arith.addi %15, %18 : vector<32x142xi32>
    %c0_i32 = arith.constant 0 : i32
    %20 = vector.broadcast %c0_i32 : i32 to vector<32x142xi32>
    %21 = arith.cmpi sge, %19, %20 : vector<32x142xi32>
    %c200_i32 = arith.constant 200 : i32
    %22 = vector.broadcast %c200_i32 : i32 to vector<32x142xi32>
    %23 = arith.cmpi slt, %19, %22 : vector<32x142xi32>
    %24 = arith.andi %21, %23 : vector<32x142xi1>
    %cst_12 = arith.constant 0.000000e+00 : bf16
    %25 = vector.broadcast %cst_12 : bf16 to vector<32x274xbf16>
    %c0_13 = arith.constant 0 : index
    %c0_14 = arith.constant 0 : index
    %26 = vector.load %arg16[%c0_13, %c0_14] : memref<32x274xbf16, #tpu.memory_space<vmem>>, vector<32x274xbf16>
    tpu.vector_store %arg16[%c0_13, %c0_14], %25 {strides = array<i32>} : memref<32x274xbf16, #tpu.memory_space<vmem>>, vector<32x274xbf16>,
    %cst_15 = arith.constant 0.000000e+00 : f32
    %27 = vector.broadcast %cst_15 : f32 to vector<32x142xf32>
    %28 = arith.select %24, %14, %27 : vector<32x142xi1>, vector<32x142xf32>
    %29 = arith.truncf %28 : vector<32x142xf32> to vector<32x142xbf16>
    %c0_16 = arith.constant 0 : index
    %c128 = arith.constant 128 : index
    %30 = vector.load %arg16[%c0_16, %c128] : memref<32x274xbf16, #tpu.memory_space<vmem>>, vector<32x142xbf16>
    tpu.vector_store %arg16[%c0_16, %c128], %29 {strides = array<i32>} : memref<32x274xbf16, #tpu.memory_space<vmem>>, vector<32x142xbf16>,
    %c0_17 = arith.constant 0 : index
    %c127 = arith.constant 127 : index
    %31 = vector.load %arg16[%c0_17, %c127] : memref<32x274xbf16, #tpu.memory_space<vmem>>, vector<32x142xbf16>
    %c0_18 = arith.constant 0 : index
    %c129 = arith.constant 129 : index
    %32 = vector.load %arg16[%c0_18, %c129] : memref<32x274xbf16, #tpu.memory_space<vmem>>, vector<32x142xbf16>
    %c0_19 = arith.constant 0 : index
    %c0_20 = arith.constant 0 : index
    %c0_21 = arith.constant 0 : index
    %33 = vector.load %arg7[%c0_19, %c0_20, %c0_21] : memref<3x32x32xbf16, #tpu.memory_space<vmem>>, vector<1x32x32xbf16>
    %34 = vector.shape_cast %33 : vector<1x32x32xbf16> to vector<32x32xbf16>
    %cst_22 = arith.constant dense<0.000000e+00> : vector<32x142xf32>
    %35 = tpu.matmul %34, %31, %cst_22 {dimension_numbers = #tpu.dot_dimension_numbers<[1], [0], [0], [1], [0, 0, 1, 1], [], []>} : vector<32x32xbf16>, vector<32x142xbf16>, vector<32x142xf32> -> vector<32x142xf32>
    %c0_23 = arith.constant 0 : index
    %c0_24 = arith.constant 0 : index
    %c0_25 = arith.constant 0 : index
    %36 = vector.load %arg8[%c0_23, %c0_24, %c0_25] : memref<3x32x32xbf16, #tpu.memory_space<vmem>>, vector<1x32x32xbf16>
    %37 = vector.shape_cast %36 : vector<1x32x32xbf16> to vector<32x32xbf16>
    %cst_26 = arith.constant dense<0.000000e+00> : vector<32x142xf32>
    %38 = tpu.matmul %37, %29, %cst_26 {dimension_numbers = #tpu.dot_dimension_numbers<[1], [0], [0], [1], [0, 0, 1, 1], [], []>} : vector<32x32xbf16>, vector<32x142xbf16>, vector<32x142xf32> -> vector<32x142xf32>
    %39 = arith.addf %35, %38 : vector<32x142xf32>
    %c0_27 = arith.constant 0 : index
    %c0_28 = arith.constant 0 : index
    %c0_29 = arith.constant 0 : index
    %40 = vector.load %arg9[%c0_27, %c0_28, %c0_29] : memref<3x32x32xbf16, #tpu.memory_space<vmem>>, vector<1x32x32xbf16>
    %41 = vector.shape_cast %40 : vector<1x32x32xbf16> to vector<32x32xbf16>
    %cst_30 = arith.constant dense<0.000000e+00> : vector<32x142xf32>
    %42 = tpu.matmul %41, %32, %cst_30 {dimension_numbers = #tpu.dot_dimension_numbers<[1], [0], [0], [1], [0, 0, 1, 1], [], []>} : vector<32x32xbf16>, vector<32x142xbf16>, vector<32x142xf32> -> vector<32x142xf32>
    %43 = arith.addf %39, %42 : vector<32x142xf32>
    %c0_31 = arith.constant 0 : index
    %c0_32 = arith.constant 0 : index
    %c0_33 = arith.constant 0 : index
    %44 = vector.load %arg10[%c0_31, %c0_32, %c0_33] : memref<3x32x1xf32, #tpu.memory_space<vmem>>, vector<1x32x1xf32>
    %45 = vector.shape_cast %44 : vector<1x32x1xf32> to vector<32x1xf32>
    %46 = vector.broadcast %45 : vector<32x1xf32> to vector<32x142xf32>
    %47 = arith.addf %43, %46 : vector<32x142xf32>
    %cst_34 = arith.constant 0.000000e+00 : f32
    %48 = vector.broadcast %cst_34 : f32 to vector<32x142xf32>
    %49 = arith.maximumf %47, %48 : vector<32x142xf32>
    %c0_35 = arith.constant 0 : index
    %c0_36 = arith.constant 0 : index
    %c0_37 = arith.constant 0 : index
    %50 = vector.load %arg11[%c0_35, %c0_36, %c0_37] : memref<3x32x32xbf16, #tpu.memory_space<vmem>>, vector<1x32x32xbf16>
    %51 = vector.shape_cast %50 : vector<1x32x32xbf16> to vector<32x32xbf16>
    %52 = arith.truncf %49 : vector<32x142xf32> to vector<32x142xbf16>
    %cst_38 = arith.constant dense<0.000000e+00> : vector<32x142xf32>
    %53 = tpu.matmul %51, %52, %cst_38 {dimension_numbers = #tpu.dot_dimension_numbers<[1], [0], [0], [1], [0, 0, 1, 1], [], []>} : vector<32x32xbf16>, vector<32x142xbf16>, vector<32x142xf32> -> vector<32x142xf32>
    %c0_39 = arith.constant 0 : index
    %c0_40 = arith.constant 0 : index
    %c0_41 = arith.constant 0 : index
    %54 = vector.load %arg12[%c0_39, %c0_40, %c0_41] : memref<3x32x1xf32, #tpu.memory_space<vmem>>, vector<1x32x1xf32>
    %55 = vector.shape_cast %54 : vector<1x32x1xf32> to vector<32x1xf32>
    %56 = vector.broadcast %55 : vector<32x1xf32> to vector<32x142xf32>
    %57 = arith.addf %53, %56 : vector<32x142xf32>
    %58 = arith.addf %14, %57 : vector<32x142xf32>
    %cst_42 = arith.constant 0.000000e+00 : f32
    %59 = vector.broadcast %cst_42 : f32 to vector<32x142xf32>
    %60 = arith.select %24, %58, %59 : vector<32x142xi1>, vector<32x142xf32>
    %61 = arith.truncf %60 : vector<32x142xf32> to vector<32x142xbf16>
    %c0_43 = arith.constant 0 : index
    %c128_44 = arith.constant 128 : index
    %62 = vector.load %arg16[%c0_43, %c128_44] : memref<32x274xbf16, #tpu.memory_space<vmem>>, vector<32x142xbf16>
    tpu.vector_store %arg16[%c0_43, %c128_44], %61 {strides = array<i32>} : memref<32x274xbf16, #tpu.memory_space<vmem>>, vector<32x142xbf16>,
    %c0_45 = arith.constant 0 : index
    %c126 = arith.constant 126 : index
    %63 = vector.load %arg16[%c0_45, %c126] : memref<32x274xbf16, #tpu.memory_space<vmem>>, vector<32x142xbf16>
    %c0_46 = arith.constant 0 : index
    %c130 = arith.constant 130 : index
    %64 = vector.load %arg16[%c0_46, %c130] : memref<32x274xbf16, #tpu.memory_space<vmem>>, vector<32x142xbf16>
    %c1 = arith.constant 1 : index
    %c0_47 = arith.constant 0 : index
    %c0_48 = arith.constant 0 : index
    %65 = vector.load %arg7[%c1, %c0_47, %c0_48] : memref<3x32x32xbf16, #tpu.memory_space<vmem>>, vector<1x32x32xbf16>
    %66 = vector.shape_cast %65 : vector<1x32x32xbf16> to vector<32x32xbf16>
    %cst_49 = arith.constant dense<0.000000e+00> : vector<32x142xf32>
    %67 = tpu.matmul %66, %63, %cst_49 {dimension_numbers = #tpu.dot_dimension_numbers<[1], [0], [0], [1], [0, 0, 1, 1], [], []>} : vector<32x32xbf16>, vector<32x142xbf16>, vector<32x142xf32> -> vector<32x142xf32>
    %c1_50 = arith.constant 1 : index
    %c0_51 = arith.constant 0 : index
    %c0_52 = arith.constant 0 : index
    %68 = vector.load %arg8[%c1_50, %c0_51, %c0_52] : memref<3x32x32xbf16, #tpu.memory_space<vmem>>, vector<1x32x32xbf16>
    %69 = vector.shape_cast %68 : vector<1x32x32xbf16> to vector<32x32xbf16>
    %cst_53 = arith.constant dense<0.000000e+00> : vector<32x142xf32>
    %70 = tpu.matmul %69, %61, %cst_53 {dimension_numbers = #tpu.dot_dimension_numbers<[1], [0], [0], [1], [0, 0, 1, 1], [], []>} : vector<32x32xbf16>, vector<32x142xbf16>, vector<32x142xf32> -> vector<32x142xf32>
    %71 = arith.addf %67, %70 : vector<32x142xf32>
    %c1_54 = arith.constant 1 : index
    %c0_55 = arith.constant 0 : index
    %c0_56 = arith.constant 0 : index
    %72 = vector.load %arg9[%c1_54, %c0_55, %c0_56] : memref<3x32x32xbf16, #tpu.memory_space<vmem>>, vector<1x32x32xbf16>
    %73 = vector.shape_cast %72 : vector<1x32x32xbf16> to vector<32x32xbf16>
    %cst_57 = arith.constant dense<0.000000e+00> : vector<32x142xf32>
    %74 = tpu.matmul %73, %64, %cst_57 {dimension_numbers = #tpu.dot_dimension_numbers<[1], [0], [0], [1], [0, 0, 1, 1], [], []>} : vector<32x32xbf16>, vector<32x142xbf16>, vector<32x142xf32> -> vector<32x142xf32>
    %75 = arith.addf %71, %74 : vector<32x142xf32>
    %c1_58 = arith.constant 1 : index
    %c0_59 = arith.constant 0 : index
    %c0_60 = arith.constant 0 : index
    %76 = vector.load %arg10[%c1_58, %c0_59, %c0_60] : memref<3x32x1xf32, #tpu.memory_space<vmem>>, vector<1x32x1xf32>
    %77 = vector.shape_cast %76 : vector<1x32x1xf32> to vector<32x1xf32>
    %78 = vector.broadcast %77 : vector<32x1xf32> to vector<32x142xf32>
    %79 = arith.addf %75, %78 : vector<32x142xf32>
    %cst_61 = arith.constant 0.000000e+00 : f32
    %80 = vector.broadcast %cst_61 : f32 to vector<32x142xf32>
    %81 = arith.maximumf %79, %80 : vector<32x142xf32>
    %c1_62 = arith.constant 1 : index
    %c0_63 = arith.constant 0 : index
    %c0_64 = arith.constant 0 : index
    %82 = vector.load %arg11[%c1_62, %c0_63, %c0_64] : memref<3x32x32xbf16, #tpu.memory_space<vmem>>, vector<1x32x32xbf16>
    %83 = vector.shape_cast %82 : vector<1x32x32xbf16> to vector<32x32xbf16>
    %84 = arith.truncf %81 : vector<32x142xf32> to vector<32x142xbf16>
    %cst_65 = arith.constant dense<0.000000e+00> : vector<32x142xf32>
    %85 = tpu.matmul %83, %84, %cst_65 {dimension_numbers = #tpu.dot_dimension_numbers<[1], [0], [0], [1], [0, 0, 1, 1], [], []>} : vector<32x32xbf16>, vector<32x142xbf16>, vector<32x142xf32> -> vector<32x142xf32>
    %c1_66 = arith.constant 1 : index
    %c0_67 = arith.constant 0 : index
    %c0_68 = arith.constant 0 : index
    %86 = vector.load %arg12[%c1_66, %c0_67, %c0_68] : memref<3x32x1xf32, #tpu.memory_space<vmem>>, vector<1x32x1xf32>
    %87 = vector.shape_cast %86 : vector<1x32x1xf32> to vector<32x1xf32>
    %88 = vector.broadcast %87 : vector<32x1xf32> to vector<32x142xf32>
    %89 = arith.addf %85, %88 : vector<32x142xf32>
    %90 = arith.addf %58, %89 : vector<32x142xf32>
    %cst_69 = arith.constant 0.000000e+00 : f32
    %91 = vector.broadcast %cst_69 : f32 to vector<32x142xf32>
    %92 = arith.select %24, %90, %91 : vector<32x142xi1>, vector<32x142xf32>
    %93 = arith.truncf %92 : vector<32x142xf32> to vector<32x142xbf16>
    %c0_70 = arith.constant 0 : index
    %c128_71 = arith.constant 128 : index
    %94 = vector.load %arg16[%c0_70, %c128_71] : memref<32x274xbf16, #tpu.memory_space<vmem>>, vector<32x142xbf16>
    tpu.vector_store %arg16[%c0_70, %c128_71], %93 {strides = array<i32>} : memref<32x274xbf16, #tpu.memory_space<vmem>>, vector<32x142xbf16>,
    %c0_72 = arith.constant 0 : index
    %c124 = arith.constant 124 : index
    %95 = vector.load %arg16[%c0_72, %c124] : memref<32x274xbf16, #tpu.memory_space<vmem>>, vector<32x142xbf16>
    %c0_73 = arith.constant 0 : index
    %c132 = arith.constant 132 : index
    %96 = vector.load %arg16[%c0_73, %c132] : memref<32x274xbf16, #tpu.memory_space<vmem>>, vector<32x142xbf16>
    %c2 = arith.constant 2 : index
    %c0_74 = arith.constant 0 : index
    %c0_75 = arith.constant 0 : index
    %97 = vector.load %arg7[%c2, %c0_74, %c0_75] : memref<3x32x32xbf16, #tpu.memory_space<vmem>>, vector<1x32x32xbf16>
    %98 = vector.shape_cast %97 : vector<1x32x32xbf16> to vector<32x32xbf16>
    %cst_76 = arith.constant dense<0.000000e+00> : vector<32x142xf32>
    %99 = tpu.matmul %98, %95, %cst_76 {dimension_numbers = #tpu.dot_dimension_numbers<[1], [0], [0], [1], [0, 0, 1, 1], [], []>} : vector<32x32xbf16>, vector<32x142xbf16>, vector<32x142xf32> -> vector<32x142xf32>
    %c2_77 = arith.constant 2 : index
    %c0_78 = arith.constant 0 : index
    %c0_79 = arith.constant 0 : index
    %100 = vector.load %arg8[%c2_77, %c0_78, %c0_79] : memref<3x32x32xbf16, #tpu.memory_space<vmem>>, vector<1x32x32xbf16>
    %101 = vector.shape_cast %100 : vector<1x32x32xbf16> to vector<32x32xbf16>
    %cst_80 = arith.constant dense<0.000000e+00> : vector<32x142xf32>
    %102 = tpu.matmul %101, %93, %cst_80 {dimension_numbers = #tpu.dot_dimension_numbers<[1], [0], [0], [1], [0, 0, 1, 1], [], []>} : vector<32x32xbf16>, vector<32x142xbf16>, vector<32x142xf32> -> vector<32x142xf32>
    %103 = arith.addf %99, %102 : vector<32x142xf32>
    %c2_81 = arith.constant 2 : index
    %c0_82 = arith.constant 0 : index
    %c0_83 = arith.constant 0 : index
    %104 = vector.load %arg9[%c2_81, %c0_82, %c0_83] : memref<3x32x32xbf16, #tpu.memory_space<vmem>>, vector<1x32x32xbf16>
    %105 = vector.shape_cast %104 : vector<1x32x32xbf16> to vector<32x32xbf16>
    %cst_84 = arith.constant dense<0.000000e+00> : vector<32x142xf32>
    %106 = tpu.matmul %105, %96, %cst_84 {dimension_numbers = #tpu.dot_dimension_numbers<[1], [0], [0], [1], [0, 0, 1, 1], [], []>} : vector<32x32xbf16>, vector<32x142xbf16>, vector<32x142xf32> -> vector<32x142xf32>
    %107 = arith.addf %103, %106 : vector<32x142xf32>
    %c2_85 = arith.constant 2 : index
    %c0_86 = arith.constant 0 : index
    %c0_87 = arith.constant 0 : index
    %108 = vector.load %arg10[%c2_85, %c0_86, %c0_87] : memref<3x32x1xf32, #tpu.memory_space<vmem>>, vector<1x32x1xf32>
    %109 = vector.shape_cast %108 : vector<1x32x1xf32> to vector<32x1xf32>
    %110 = vector.broadcast %109 : vector<32x1xf32> to vector<32x142xf32>
    %111 = arith.addf %107, %110 : vector<32x142xf32>
    %cst_88 = arith.constant 0.000000e+00 : f32
    %112 = vector.broadcast %cst_88 : f32 to vector<32x142xf32>
    %113 = arith.maximumf %111, %112 : vector<32x142xf32>
    %c2_89 = arith.constant 2 : index
    %c0_90 = arith.constant 0 : index
    %c0_91 = arith.constant 0 : index
    %114 = vector.load %arg11[%c2_89, %c0_90, %c0_91] : memref<3x32x32xbf16, #tpu.memory_space<vmem>>, vector<1x32x32xbf16>
    %115 = vector.shape_cast %114 : vector<1x32x32xbf16> to vector<32x32xbf16>
    %116 = arith.truncf %113 : vector<32x142xf32> to vector<32x142xbf16>
    %cst_92 = arith.constant dense<0.000000e+00> : vector<32x142xf32>
    %117 = tpu.matmul %115, %116, %cst_92 {dimension_numbers = #tpu.dot_dimension_numbers<[1], [0], [0], [1], [0, 0, 1, 1], [], []>} : vector<32x32xbf16>, vector<32x142xbf16>, vector<32x142xf32> -> vector<32x142xf32>
    %c2_93 = arith.constant 2 : index
    %c0_94 = arith.constant 0 : index
    %c0_95 = arith.constant 0 : index
    %118 = vector.load %arg12[%c2_93, %c0_94, %c0_95] : memref<3x32x1xf32, #tpu.memory_space<vmem>>, vector<1x32x1xf32>
    %119 = vector.shape_cast %118 : vector<1x32x1xf32> to vector<32x1xf32>
    %120 = vector.broadcast %119 : vector<32x1xf32> to vector<32x142xf32>
    %121 = arith.addf %117, %120 : vector<32x142xf32>
    %122 = arith.addf %90, %121 : vector<32x142xf32>
    %123 = vector.extract_strided_slice %122 {offsets = [0, 7], sizes = [32, 128], strides = [1, 1]} : vector<32x142xf32> to vector<32x128xf32>
    %124 = arith.truncf %123 : vector<32x128xf32> to vector<32x128xbf16>
    %c0_96 = arith.constant 0 : index
    %c0_97 = arith.constant 0 : index
    %125 = vector.load %arg13[%c0_96, %c0_97] : memref<8x32xbf16, #tpu.memory_space<vmem>>, vector<8x32xbf16>
    %cst_98 = arith.constant dense<0.000000e+00> : vector<8x128xf32>
    %126 = tpu.matmul %125, %124, %cst_98 {dimension_numbers = #tpu.dot_dimension_numbers<[1], [0], [0], [1], [0, 0, 1, 1], [], []>} : vector<8x32xbf16>, vector<32x128xbf16>, vector<8x128xf32> -> vector<8x128xf32>
    %c0_99 = arith.constant 0 : index
    %c0_100 = arith.constant 0 : index
    %127 = vector.load %arg14[%c0_99, %c0_100] : memref<8x1xf32, #tpu.memory_space<vmem>>, vector<8x1xf32>
    %128 = vector.broadcast %127 : vector<8x1xf32> to vector<8x128xf32>
    %129 = arith.addf %126, %128 : vector<8x128xf32>
    %c0_101 = arith.constant 0 : index
    %c0_102 = arith.constant 0 : index
    %c0_103 = arith.constant 0 : index
    %130 = vector.load %arg15[%c0_101, %c0_102, %c0_103] : memref<1x8x128xf32, #tpu.memory_space<vmem>>, vector<1x8x128xf32>
    %131 = vector.shape_cast %130 : vector<1x8x128xf32> to vector<8x128xf32>
    %132 = vector.shape_cast %129 : vector<8x128xf32> to vector<1x8x128xf32>
    tpu.vector_store %arg15[%c0_101, %c0_102, %c0_103], %132 {strides = array<i32>} : memref<1x8x128xf32, #tpu.memory_space<vmem>>, vector<1x8x128xf32>,
    return
  }
  func.func @transform_0(%arg0: i32, %arg1: i32) -> (i32, i32, i32) {
    %c1_i32 = arith.constant 1 : i32
    %0 = arith.subi %arg1, %c1_i32 : i32
    %c0_i32 = arith.constant 0 : i32
    %1 = arith.maxsi %0, %c0_i32 : i32
    %c0_i32_0 = arith.constant 0 : i32
    %c0_i32_1 = arith.constant 0 : i32
    return %arg0, %c0_i32_0, %1 : i32, i32, i32
  }
  func.func @transform_1(%arg0: i32, %arg1: i32) -> (i32, i32, i32) {
    %c0_i32 = arith.constant 0 : i32
    %c0_i32_0 = arith.constant 0 : i32
    return %arg0, %c0_i32, %arg1 : i32, i32, i32
  }
  func.func @transform_2(%arg0: i32, %arg1: i32) -> (i32, i32, i32) {
    %c1_i32 = arith.constant 1 : i32
    %0 = arith.addi %arg1, %c1_i32 : i32
    %c1_i32_0 = arith.constant 1 : i32
    %1 = arith.minsi %0, %c1_i32_0 : i32
    %c0_i32 = arith.constant 0 : i32
    %c0_i32_1 = arith.constant 0 : i32
    return %arg0, %c0_i32, %1 : i32, i32, i32
  }
  func.func @transform_3(%arg0: i32, %arg1: i32) -> (i32, i32) {
    %c0_i32 = arith.constant 0 : i32
    %c0_i32_0 = arith.constant 0 : i32
    %c0_i32_1 = arith.constant 0 : i32
    return %c0_i32, %c0_i32_0 : i32, i32
  }
  func.func @transform_4(%arg0: i32, %arg1: i32) -> (i32, i32) {
    %c0_i32 = arith.constant 0 : i32
    %c0_i32_0 = arith.constant 0 : i32
    %c0_i32_1 = arith.constant 0 : i32
    return %c0_i32, %c0_i32_0 : i32, i32
  }
  func.func @transform_5(%arg0: i32, %arg1: i32) -> (i32, i32, i32) {
    %c0_i32 = arith.constant 0 : i32
    %c0_i32_0 = arith.constant 0 : i32
    %c0_i32_1 = arith.constant 0 : i32
    %c0_i32_2 = arith.constant 0 : i32
    return %c0_i32, %c0_i32_0, %c0_i32_1 : i32, i32, i32
  }
  func.func @transform_6(%arg0: i32, %arg1: i32) -> (i32, i32, i32) {
    %c0_i32 = arith.constant 0 : i32
    %c0_i32_0 = arith.constant 0 : i32
    %c0_i32_1 = arith.constant 0 : i32
    %c0_i32_2 = arith.constant 0 : i32
    return %c0_i32, %c0_i32_0, %c0_i32_1 : i32, i32, i32
  }
  func.func @transform_7(%arg0: i32, %arg1: i32) -> (i32, i32, i32) {
    %c0_i32 = arith.constant 0 : i32
    %c0_i32_0 = arith.constant 0 : i32
    %c0_i32_1 = arith.constant 0 : i32
    %c0_i32_2 = arith.constant 0 : i32
    return %c0_i32, %c0_i32_0, %c0_i32_1 : i32, i32, i32
  }
  func.func @transform_8(%arg0: i32, %arg1: i32) -> (i32, i32, i32) {
    %c0_i32 = arith.constant 0 : i32
    %c0_i32_0 = arith.constant 0 : i32
    %c0_i32_1 = arith.constant 0 : i32
    %c0_i32_2 = arith.constant 0 : i32
    return %c0_i32, %c0_i32_0, %c0_i32_1 : i32, i32, i32
  }
  func.func @transform_9(%arg0: i32, %arg1: i32) -> (i32, i32, i32) {
    %c0_i32 = arith.constant 0 : i32
    %c0_i32_0 = arith.constant 0 : i32
    %c0_i32_1 = arith.constant 0 : i32
    %c0_i32_2 = arith.constant 0 : i32
    return %c0_i32, %c0_i32_0, %c0_i32_1 : i32, i32, i32
  }
  func.func @transform_10(%arg0: i32, %arg1: i32) -> (i32, i32, i32) {
    %c0_i32 = arith.constant 0 : i32
    %c0_i32_0 = arith.constant 0 : i32
    %c0_i32_1 = arith.constant 0 : i32
    %c0_i32_2 = arith.constant 0 : i32
    return %c0_i32, %c0_i32_0, %c0_i32_1 : i32, i32, i32
  }
  func.func @transform_11(%arg0: i32, %arg1: i32) -> (i32, i32) {
    %c0_i32 = arith.constant 0 : i32
    %c0_i32_0 = arith.constant 0 : i32
    %c0_i32_1 = arith.constant 0 : i32
    return %c0_i32, %c0_i32_0 : i32, i32
  }
  func.func @transform_12(%arg0: i32, %arg1: i32) -> (i32, i32) {
    %c0_i32 = arith.constant 0 : i32
    %c0_i32_0 = arith.constant 0 : i32
    %c0_i32_1 = arith.constant 0 : i32
    return %c0_i32, %c0_i32_0 : i32, i32
  }
  func.func @transform_13(%arg0: i32, %arg1: i32) -> (i32, i32, i32) {
    %c0_i32 = arith.constant 0 : i32
    %c0_i32_0 = arith.constant 0 : i32
    return %arg0, %c0_i32, %arg1 : i32, i32, i32
  }
}

</mosaic_0001>

<llo_original>
// kernel: tpu_custom_call.1
$region0: #{tpu_custom_call.1}
  #allocation0 [shape = 'u32[]', space=smem, size = 0x4, offset = 0x4, fixed_abs, tag = 'smem constant byte address 0x4 - core index']
  #allocation1 [shape = 'u32[144,128]{1,0:T(1,128)}', space=vmem, size = 0x12000, scoped, tag = 'internal scratch']
  #allocation2 [shape = 'bf16[32,274]{1,0:T(16,128)(2,1)}', space=vmem, size = 0x6000, scoped, tag = 'scratch operand']
  %s0 = inlined_call_operand.vmem [shape: f32[2,4,256], index: 0, kind: input, shape index: {}]
  %s1 = inlined_call_operand.vmem [shape: f32[2,4,256], index: 1, kind: input, shape index: {}]
  %s2 = inlined_call_operand.vmem [shape: f32[2,4,256], index: 2, kind: input, shape index: {}]
  %s3 = inlined_call_operand.vmem [shape: bf16[32,4], index: 3, kind: input, shape index: {}]
  %s4 = inlined_call_operand.vmem [shape: f32[32,1], index: 4, kind: input, shape index: {}]
  %s5 = inlined_call_operand.vmem [shape: bf16[3,32,32], index: 5, kind: input, shape index: {}]
  %s6 = inlined_call_operand.vmem [shape: bf16[3,32,32], index: 6, kind: input, shape index: {}]
  %s7 = inlined_call_operand.vmem [shape: bf16[3,32,32], index: 7, kind: input, shape index: {}]
  %s8 = inlined_call_operand.vmem [shape: f32[3,32,1], index: 8, kind: input, shape index: {}]
  %s9 = inlined_call_operand.vmem [shape: bf16[3,32,32], index: 9, kind: input, shape index: {}]
  %s10 = inlined_call_operand.vmem [shape: f32[3,32,1], index: 10, kind: input, shape index: {}]
  %s11 = inlined_call_operand.vmem [shape: bf16[8,32], index: 11, kind: input, shape index: {}]
  %s12 = inlined_call_operand.vmem [shape: f32[8,1], index: 12, kind: input, shape index: {}]
  %s13 = inlined_call_operand.hbm [shape: f32[2,8,256], index: 13, kind: output, shape index: {}]
  %s14 = sld [smem:[#allocation0]]
  $region85: #{tpu_custom_call.1} parent=0
    _
  %s16 = ssub.s32 1, %s14
  %s17 = scalar_select 0, %s16, %s14
  $region1: #{tpu_custom_call.1} parent=0
    #allocation3 [shape = 'u8[8192]{0}', space=vmem, size = 0x2000, scoped, tag = 'output window, operand 0']
    #allocation4 [shape = 's32[2]{0}', space=sflag, size = 0x8, scoped, tag = 'scoped memory for tpu_custom_call.1']
    %18 = vsyncpa [#allocation4], 0
    %s19 = scalar_lea.sflag [#allocation4], 1
    %20 = vsyncpa %s19, 0
    loop: start=0, step=1, limit=6
    $region2: #{tpu_custom_call.1} parent=1 // loop_pre_header
      _
    $region3: #{tpu_custom_call.1} parent=1 // loop_header
      %s22 = sphi 0, %s26
      %p23 = scmp.ge.s32.totalorder %s22, 6
      %s29 = sphi 0, %s41
      %s30 = sphi 0, %s37
      %s31 = sphi 0, %s29
      %s32 = sphi 0, %s30
      %s33 = sphi 0, %s31
      %s34 = sphi 0, %s32
      %s52 = sphi 0, %s54
      %s55 = sphi 0, %s52
      %s56 = sphi 0, %s55
      %s72 = sphi 0, %s56
      %s80 = sphi 0, %s82
      %s83 = sphi 0, %s80
      %s84 = sphi 0, %s83
      %s100 = sphi 0, %s84
      %s114 = sphi 0, %s116
      %s117 = sphi 0, %s114
      %s118 = sphi 0, %s117
      %s134 = sphi 0, %s118
      %s138 = sphi 0, %s138
      %s140 = sphi 0, %s138
      %s141 = sphi 0, %s140
      %s155 = sphi 0, %s141
      %s159 = sphi 0, %s159
      %s161 = sphi 0, %s159
      %s162 = sphi 0, %s161
      %s176 = sphi 0, %s162
      %s180 = sphi 0, %s180
      %s182 = sphi 0, %s180
      %s183 = sphi 0, %s182
      %s197 = sphi 0, %s183
      %s201 = sphi 0, %s201
      %s203 = sphi 0, %s201
      %s204 = sphi 0, %s203
      %s218 = sphi 0, %s204
      %s222 = sphi 0, %s222
      %s224 = sphi 0, %s222
      %s225 = sphi 0, %s224
      %s239 = sphi 0, %s225
      %s243 = sphi 0, %s243
      %s245 = sphi 0, %s243
      %s246 = sphi 0, %s245
      %s260 = sphi 0, %s246
      %s264 = sphi 0, %s264
      %s266 = sphi 0, %s264
      %s267 = sphi 0, %s266
      %s281 = sphi 0, %s267
      %s285 = sphi 0, %s285
      %s287 = sphi 0, %s285
      %s288 = sphi 0, %s287
      %s302 = sphi 0, %s288
      %s306 = sphi 0, %s306
      %s308 = sphi 0, %s306
      %s309 = sphi 0, %s308
      %s323 = sphi 0, %s309
      %s327 = sphi 0, %s327
      %s329 = sphi 0, %s327
      %s330 = sphi 0, %s329
      %s344 = sphi 0, %s330
      %s352 = sphi 0, %s354
      %s355 = sphi 0, %s352
      %s356 = sphi 0, %s355
      %s372 = sphi 0, %s356
    $region4: #{tpu_custom_call.1} parent=1 // loop_header_branch
      %25 = sbr.rel (%p23) target = $region8
    $region5: #{tpu_custom_call.1} parent=1 // loop_body
      %s27 = ssub.s32 %s22, 1
      %s28 = ssub.s32 %s22, 2
      %s35 = sadd.s32 1, %s30
      %p36 = scmp.ge.s32.totalorder %s35, 2
      %s37 = scalar_select %p36, 0, %s35
      %s38 = sadd.s32 1, %s29
      %s39 = scalar_select %p36, %s38, %s29
      %p40 = scmp.ge.s32.totalorder %s39, 2
      %s41 = scalar_select %p40, 0, %s39
      %s42 = ssub.s32 %s30, 1
      %p43 = scmp.gt.s32.totalorder %s42, 0
      %s44 = scalar_select %p43, %s42, 0
      %s45 = ssub.s32 %s37, 1
      %p46 = scmp.gt.s32.totalorder %s45, 0
      %s47 = scalar_select %p46, %s45, 0
      %s48 = ssub.s32 %s29, %s41
      %s49 = ssub.s32 %s44, %s47
      %s50 = sor.u32 %s48, %s49
      %p51 = scmp.eq.s32.totalorder %s50, 0
      %s53 = sadd.s32 %s52, 1
      %s54 = scalar_select %p51, %s52, %s53
      %p57 = pneg %p51
      %p58 = scmp.eq.s32.totalorder %s22, 3
      %p59 = por %p57, %p58
      %p60 = scmp.ne.s32.totalorder %s52, %s55
      %p61 = scmp.eq.s32.totalorder %s22, 0
      %p62 = por %p60, %p61
      %p63 = scmp.ne.s32.totalorder %s52, %s55
      %p64 = scmp.eq.s32.totalorder %s27, 3
      %p65 = por %p63, %p64
      %p66 = scmp.ne.s32.totalorder %s55, %s56
      %p67 = scmp.eq.s32.totalorder %s27, 0
      %p68 = por %p66, %p67
      %p69 = scmp.ne.s32.totalorder %s55, %s56
      %p70 = scmp.eq.s32.totalorder %s28, 3
      %p71 = por %p69, %p70
      %p73 = scmp.ne.s32.totalorder %s56, %s72
      %p74 = scmp.eq.s32.totalorder %s28, 0
      %p75 = por %p73, %p74
      %s76 = ssub.s32 %s29, %s41
      %s77 = ssub.s32 %s30, %s37
      %s78 = sor.u32 %s76, %s77
      %p79 = scmp.eq.s32.totalorder %s78, 0
      %s81 = sadd.s32 %s80, 1
      %s82 = scalar_select %p79, %s80, %s81
      %p85 = pneg %p79
      %p86 = scmp.eq.s32.totalorder %s22, 3
      %p87 = por %p85, %p86
      %p88 = scmp.ne.s32.totalorder %s80, %s83
      %p89 = scmp.eq.s32.totalorder %s22, 0
      %p90 = por %p88, %p89
      %p91 = scmp.ne.s32.totalorder %s80, %s83
      %p92 = scmp.eq.s32.totalorder %s27, 3
      %p93 = por %p91, %p92
      %p94 = scmp.ne.s32.totalorder %s83, %s84
      %p95 = scmp.eq.s32.totalorder %s27, 0
      %p96 = por %p94, %p95
      %p97 = scmp.ne.s32.totalorder %s83, %s84
      %p98 = scmp.eq.s32.totalorder %s28, 3
      %p99 = por %p97, %p98
      %p101 = scmp.ne.s32.totalorder %s84, %s100
      %p102 = scmp.eq.s32.totalorder %s28, 0
      %p103 = por %p101, %p102
      %s104 = sadd.s32 %s30, 1
      %p105 = scmp.lt.s32.totalorder %s104, 1
      %s106 = scalar_select %p105, %s104, 1
      %s107 = sadd.s32 %s37, 1
      %p108 = scmp.lt.s32.totalorder %s107, 1
      %s109 = scalar_select %p108, %s107, 1
      %s110 = ssub.s32 %s29, %s41
      %s111 = ssub.s32 %s106, %s109
      %s112 = sor.u32 %s110, %s111
      %p113 = scmp.eq.s32.totalorder %s112, 0
      %s115 = sadd.s32 %s114, 1
      %s116 = scalar_select %p113, %s114, %s115
      %p119 = pneg %p113
      %p120 = scmp.eq.s32.totalorder %s22, 3
      %p121 = por %p119, %p120
      %p122 = scmp.ne.s32.totalorder %s114, %s117
      %p123 = scmp.eq.s32.totalorder %s22, 0
      %p124 = por %p122, %p123
      %p125 = scmp.ne.s32.totalorder %s114, %s117
      %p126 = scmp.eq.s32.totalorder %s27, 3
      %p127 = por %p125, %p126
      %p128 = scmp.ne.s32.totalorder %s117, %s118
      %p129 = scmp.eq.s32.totalorder %s27, 0
      %p130 = por %p128, %p129
      %p131 = scmp.ne.s32.totalorder %s117, %s118
      %p132 = scmp.eq.s32.totalorder %s28, 3
      %p133 = por %p131, %p132
      %p135 = scmp.ne.s32.totalorder %s118, %s134
      %p136 = scmp.eq.s32.totalorder %s28, 0
      %p137 = por %p135, %p136
      %s139 = sadd.s32 %s138, 1
      %p142 = scmp.eq.s32.totalorder %s22, 3
      %p143 = scmp.ne.s32.totalorder %s138, %s140
      %p144 = scmp.eq.s32.totalorder %s22, 0
      %p145 = por %p143, %p144
      %p146 = scmp.ne.s32.totalorder %s138, %s140
      %p147 = scmp.eq.s32.totalorder %s27, 3
      %p148 = por %p146, %p147
      %p149 = scmp.ne.s32.totalorder %s140, %s141
      %p150 = scmp.eq.s32.totalorder %s27, 0
      %p151 = por %p149, %p150
      %p152 = scmp.ne.s32.totalorder %s140, %s141
      %p153 = scmp.eq.s32.totalorder %s28, 3
      %p154 = por %p152, %p153
      %p156 = scmp.ne.s32.totalorder %s141, %s155
      %p157 = scmp.eq.s32.totalorder %s28, 0
      %p158 = por %p156, %p157
      %s160 = sadd.s32 %s159, 1
      %p163 = scmp.eq.s32.totalorder %s22, 3
      %p164 = scmp.ne.s32.totalorder %s159, %s161
      %p165 = scmp.eq.s32.totalorder %s22, 0
      %p166 = por %p164, %p165
      %p167 = scmp.ne.s32.totalorder %s159, %s161
      %p168 = scmp.eq.s32.totalorder %s27, 3
      %p169 = por %p167, %p168
      %p170 = scmp.ne.s32.totalorder %s161, %s162
      %p171 = scmp.eq.s32.totalorder %s27, 0
      %p172 = por %p170, %p171
      %p173 = scmp.ne.s32.totalorder %s161, %s162
      %p174 = scmp.eq.s32.totalorder %s28, 3
      %p175 = por %p173, %p174
      %p177 = scmp.ne.s32.totalorder %s162, %s176
      %p178 = scmp.eq.s32.totalorder %s28, 0
      %p179 = por %p177, %p178
      %s181 = sadd.s32 %s180, 1
      %p184 = scmp.eq.s32.totalorder %s22, 3
      %p185 = scmp.ne.s32.totalorder %s180, %s182
      %p186 = scmp.eq.s32.totalorder %s22, 0
      %p187 = por %p185, %p186
      %p188 = scmp.ne.s32.totalorder %s180, %s182
      %p189 = scmp.eq.s32.totalorder %s27, 3
      %p190 = por %p188, %p189
      %p191 = scmp.ne.s32.totalorder %s182, %s183
      %p192 = scmp.eq.s32.totalorder %s27, 0
      %p193 = por %p191, %p192
      %p194 = scmp.ne.s32.totalorder %s182, %s183
      %p195 = scmp.eq.s32.totalorder %s28, 3
      %p196 = por %p194, %p195
      %p198 = scmp.ne.s32.totalorder %s183, %s197
      %p199 = scmp.eq.s32.totalorder %s28, 0
      %p200 = por %p198, %p199
      %s202 = sadd.s32 %s201, 1
      %p205 = scmp.eq.s32.totalorder %s22, 3
      %p206 = scmp.ne.s32.totalorder %s201, %s203
      %p207 = scmp.eq.s32.totalorder %s22, 0
      %p208 = por %p206, %p207
      %p209 = scmp.ne.s32.totalorder %s201, %s203
      %p210 = scmp.eq.s32.totalorder %s27, 3
      %p211 = por %p209, %p210
      %p212 = scmp.ne.s32.totalorder %s203, %s204
      %p213 = scmp.eq.s32.totalorder %s27, 0
      %p214 = por %p212, %p213
      %p215 = scmp.ne.s32.totalorder %s203, %s204
      %p216 = scmp.eq.s32.totalorder %s28, 3
      %p217 = por %p215, %p216
      %p219 = scmp.ne.s32.totalorder %s204, %s218
      %p220 = scmp.eq.s32.totalorder %s28, 0
      %p221 = por %p219, %p220
      %s223 = sadd.s32 %s222, 1
      %p226 = scmp.eq.s32.totalorder %s22, 3
      %p227 = scmp.ne.s32.totalorder %s222, %s224
      %p228 = scmp.eq.s32.totalorder %s22, 0
      %p229 = por %p227, %p228
      %p230 = scmp.ne.s32.totalorder %s222, %s224
      %p231 = scmp.eq.s32.totalorder %s27, 3
      %p232 = por %p230, %p231
      %p233 = scmp.ne.s32.totalorder %s224, %s225
      %p234 = scmp.eq.s32.totalorder %s27, 0
      %p235 = por %p233, %p234
      %p236 = scmp.ne.s32.totalorder %s224, %s225
      %p237 = scmp.eq.s32.totalorder %s28, 3
      %p238 = por %p236, %p237
      %p240 = scmp.ne.s32.totalorder %s225, %s239
      %p241 = scmp.eq.s32.totalorder %s28, 0
      %p242 = por %p240, %p241
      %s244 = sadd.s32 %s243, 1
      %p247 = scmp.eq.s32.totalorder %s22, 3
      %p248 = scmp.ne.s32.totalorder %s243, %s245
      %p249 = scmp.eq.s32.totalorder %s22, 0
      %p250 = por %p248, %p249
      %p251 = scmp.ne.s32.totalorder %s243, %s245
      %p252 = scmp.eq.s32.totalorder %s27, 3
      %p253 = por %p251, %p252
      %p254 = scmp.ne.s32.totalorder %s245, %s246
      %p255 = scmp.eq.s32.totalorder %s27, 0
      %p256 = por %p254, %p255
      %p257 = scmp.ne.s32.totalorder %s245, %s246
      %p258 = scmp.eq.s32.totalorder %s28, 3
      %p259 = por %p257, %p258
      %p261 = scmp.ne.s32.totalorder %s246, %s260
      %p262 = scmp.eq.s32.totalorder %s28, 0
      %p263 = por %p261, %p262
      %s265 = sadd.s32 %s264, 1
      %p268 = scmp.eq.s32.totalorder %s22, 3
      %p269 = scmp.ne.s32.totalorder %s264, %s266
      %p270 = scmp.eq.s32.totalorder %s22, 0
      %p271 = por %p269, %p270
      %p272 = scmp.ne.s32.totalorder %s264, %s266
      %p273 = scmp.eq.s32.totalorder %s27, 3
      %p274 = por %p272, %p273
      %p275 = scmp.ne.s32.totalorder %s266, %s267
      %p276 = scmp.eq.s32.totalorder %s27, 0
      %p277 = por %p275, %p276
      %p278 = scmp.ne.s32.totalorder %s266, %s267
      %p279 = scmp.eq.s32.totalorder %s28, 3
      %p280 = por %p278, %p279
      %p282 = scmp.ne.s32.totalorder %s267, %s281
      %p283 = scmp.eq.s32.totalorder %s28, 0
      %p284 = por %p282, %p283
      %s286 = sadd.s32 %s285, 1
      %p289 = scmp.eq.s32.totalorder %s22, 3
      %p290 = scmp.ne.s32.totalorder %s285, %s287
      %p291 = scmp.eq.s32.totalorder %s22, 0
      %p292 = por %p290, %p291
      %p293 = scmp.ne.s32.totalorder %s285, %s287
      %p294 = scmp.eq.s32.totalorder %s27, 3
      %p295 = por %p293, %p294
      %p296 = scmp.ne.s32.totalorder %s287, %s288
      %p297 = scmp.eq.s32.totalorder %s27, 0
      %p298 = por %p296, %p297
      %p299 = scmp.ne.s32.totalorder %s287, %s288
      %p300 = scmp.eq.s32.totalorder %s28, 3
      %p301 = por %p299, %p300
      %p303 = scmp.ne.s32.totalorder %s288, %s302
      %p304 = scmp.eq.s32.totalorder %s28, 0
      %p305 = por %p303, %p304
      %s307 = sadd.s32 %s306, 1
      %p310 = scmp.eq.s32.totalorder %s22, 3
      %p311 = scmp.ne.s32.totalorder %s306, %s308
      %p312 = scmp.eq.s32.totalorder %s22, 0
      %p313 = por %p311, %p312
      %p314 = scmp.ne.s32.totalorder %s306, %s308
      %p315 = scmp.eq.s32.totalorder %s27, 3
      %p316 = por %p314, %p315
      %p317 = scmp.ne.s32.totalorder %s308, %s309
      %p318 = scmp.eq.s32.totalorder %s27, 0
      %p319 = por %p317, %p318
      %p320 = scmp.ne.s32.totalorder %s308, %s309
      %p321 = scmp.eq.s32.totalorder %s28, 3
      %p322 = por %p320, %p321
      %p324 = scmp.ne.s32.totalorder %s309, %s323
      %p325 = scmp.eq.s32.totalorder %s28, 0
      %p326 = por %p324, %p325
      %s328 = sadd.s32 %s327, 1
      %p331 = scmp.eq.s32.totalorder %s22, 3
      %p332 = scmp.ne.s32.totalorder %s327, %s329
      %p333 = scmp.eq.s32.totalorder %s22, 0
      %p334 = por %p332, %p333
      %p335 = scmp.ne.s32.totalorder %s327, %s329
      %p336 = scmp.eq.s32.totalorder %s27, 3
      %p337 = por %p335, %p336
      %p338 = scmp.ne.s32.totalorder %s329, %s330
      %p339 = scmp.eq.s32.totalorder %s27, 0
      %p340 = por %p338, %p339
      %p341 = scmp.ne.s32.totalorder %s329, %s330
      %p342 = scmp.eq.s32.totalorder %s28, 3
      %p343 = por %p341, %p342
      %p345 = scmp.ne.s32.totalorder %s330, %s344
      %p346 = scmp.eq.s32.totalorder %s28, 0
      %p347 = por %p345, %p346
      %s348 = ssub.s32 %s29, %s41
      %s349 = ssub.s32 %s30, %s37
      %s350 = sor.u32 %s348, %s349
      %p351 = scmp.eq.s32.totalorder %s350, 0
      %s353 = sadd.s32 %s352, 1
      %s354 = scalar_select %p351, %s352, %s353
      %p357 = pneg %p351
      %p358 = scmp.eq.s32.totalorder %s22, 3
      %p359 = por %p357, %p358
      %p360 = scmp.ne.s32.totalorder %s352, %s355
      %p361 = scmp.eq.s32.totalorder %s22, 0
      %p362 = por %p360, %p361
      %p363 = scmp.ne.s32.totalorder %s352, %s355
      %p364 = scmp.eq.s32.totalorder %s27, 3
      %p365 = por %p363, %p364
      %p366 = scmp.ne.s32.totalorder %s355, %s356
      %p367 = scmp.eq.s32.totalorder %s27, 0
      %p368 = por %p366, %p367
      %p369 = scmp.ne.s32.totalorder %s355, %s356
      %p370 = scmp.eq.s32.totalorder %s28, 3
      %p371 = por %p369, %p370
      %p373 = scmp.ne.s32.totalorder %s356, %s372
      %p374 = scmp.eq.s32.totalorder %s28, 0
      %p375 = por %p373, %p374
      %p376 = scmp.le.s32.totalorder 1, %s22
      %p377 = scmp.lt.s32.totalorder %s22, 5
      %p378 = pnand %p376, %p377
      %p379 = pneg %p378
      // Predicated region
      $region9: #{tpu_custom_call.1} parent=5 // pred_check
        _
      $region10: #{tpu_custom_call.1} parent=5 // pred_check_branch
        %381 = sbr.rel (%p378) target = $region12
      $region11: #{tpu_custom_call.1} parent=5 // pred_region
        %s382 = ssub.s32 %s22, 1
        // Predicated region
        $region13: #{tpu_custom_call.1} parent=11 // pred_check
          %p383 = pneg %p151
        $region14: #{tpu_custom_call.1} parent=11 // pred_check_branch
          %385 = sbr.rel (%p383) target = $region16
        $region15: #{tpu_custom_call.1} parent=11 // pred_region
          _
        $region16: #{tpu_custom_call.1} parent=11 // pred_fallthru
          _
        // Predicated region
        $region17: #{tpu_custom_call.1} parent=11 // pred_check
          %p386 = pneg %p172
        $region18: #{tpu_custom_call.1} parent=11 // pred_check_branch
          %388 = sbr.rel (%p386) target = $region20
        $region19: #{tpu_custom_call.1} parent=11 // pred_region
          _
        $region20: #{tpu_custom_call.1} parent=11 // pred_fallthru
          _
        // Predicated region
        $region21: #{tpu_custom_call.1} parent=11 // pred_check
          %p389 = pneg %p193
        $region22: #{tpu_custom_call.1} parent=11 // pred_check_branch
          %391 = sbr.rel (%p389) target = $region24
        $region23: #{tpu_custom_call.1} parent=11 // pred_region
          _
        $region24: #{tpu_custom_call.1} parent=11 // pred_fallthru
          _
        // Predicated region
        $region25: #{tpu_custom_call.1} parent=11 // pred_check
          %p392 = pneg %p214
        $region26: #{tpu_custom_call.1} parent=11 // pred_check_branch
          %394 = sbr.rel (%p392) target = $region28
        $region27: #{tpu_custom_call.1} parent=11 // pred_region
          _
        $region28: #{tpu_custom_call.1} parent=11 // pred_fallthru
          _
        // Predicated region
        $region29: #{tpu_custom_call.1} parent=11 // pred_check
          %p395 = pneg %p235
        $region30: #{tpu_custom_call.1} parent=11 // pred_check_branch
          %397 = sbr.rel (%p395) target = $region32
        $region31: #{tpu_custom_call.1} parent=11 // pred_region
          _
        $region32: #{tpu_custom_call.1} parent=11 // pred_fallthru
          _
        // Predicated region
        $region33: #{tpu_custom_call.1} parent=11 // pred_check
          %p398 = pneg %p256
        $region34: #{tpu_custom_call.1} parent=11 // pred_check_branch
          %400 = sbr.rel (%p398) target = $region36
        $region35: #{tpu_custom_call.1} parent=11 // pred_region
          _
        $region36: #{tpu_custom_call.1} parent=11 // pred_fallthru
          _
        // Predicated region
        $region37: #{tpu_custom_call.1} parent=11 // pred_check
          %p401 = pneg %p277
        $region38: #{tpu_custom_call.1} parent=11 // pred_check_branch
          %403 = sbr.rel (%p401) target = $region40
        $region39: #{tpu_custom_call.1} parent=11 // pred_region
          _
        $region40: #{tpu_custom_call.1} parent=11 // pred_fallthru
          _
        // Predicated region
        $region41: #{tpu_custom_call.1} parent=11 // pred_check
          %p404 = pneg %p298
        $region42: #{tpu_custom_call.1} parent=11 // pred_check_branch
          %406 = sbr.rel (%p404) target = $region44
        $region43: #{tpu_custom_call.1} parent=11 // pred_region
          _
        $region44: #{tpu_custom_call.1} parent=11 // pred_fallthru
          _
        // Predicated region
        $region45: #{tpu_custom_call.1} parent=11 // pred_check
          %p407 = pneg %p319
        $region46: #{tpu_custom_call.1} parent=11 // pred_check_branch
          %409 = sbr.rel (%p407) target = $region48
        $region47: #{tpu_custom_call.1} parent=11 // pred_region
          _
        $region48: #{tpu_custom_call.1} parent=11 // pred_fallthru
          _
        // Predicated region
        $region49: #{tpu_custom_call.1} parent=11 // pred_check
          %p410 = pneg %p340
        $region50: #{tpu_custom_call.1} parent=11 // pred_check_branch
          %412 = sbr.rel (%p410) target = $region52
        $region51: #{tpu_custom_call.1} parent=11 // pred_region
          _
        $region52: #{tpu_custom_call.1} parent=11 // pred_fallthru
          _
      $region12: #{tpu_custom_call.1} parent=5 // pred_fallthru
        _
      %p413 = scmp.lt.s32.totalorder %s22, 4
      // Predicated region
      $region53: #{tpu_custom_call.1} parent=5 // pred_check
        %p414 = pneg %p413
      $region54: #{tpu_custom_call.1} parent=5 // pred_check_branch
        %416 = sbr.rel (%p414) target = $region56
      $region55: #{tpu_custom_call.1} parent=5 // pred_region
        // Predicated region
        $region57: #{tpu_custom_call.1} parent=55 // pred_check
          %p417 = pneg %p62
        $region58: #{tpu_custom_call.1} parent=55 // pred_check_branch
          %419 = sbr.rel (%p417) target = $region60
        $region59: #{tpu_custom_call.1} parent=55 // pred_region
          %s420 = ssub.s32 %s30, 1
          %p421 = scmp.gt.s32.totalorder %s420, 0
          %s422 = scalar_select %p421, %s420, 0
          %p423 = scmp.lt.s32.totalorder %s29, 1
          %s424 = scalar_select %p423, %s29, 1
          %p425 = scmp.lt.s32.totalorder %s422, 1
          %s426 = scalar_select %p425, %s422, 1
          %s427 = smul.addr %s424, 2
          %s428 = sadd.s32 %s426, %s427
          %s429 = smul.addr %s428, 4
          %s430 = scalar_lea.vmem %s0, %s429
          %s431 = ssub.s32 %s30, 1
          %p432 = scmp.gt.s32.totalorder %s431, 0
          %s433 = scalar_select %p432, %s431, 0
        $region60: #{tpu_custom_call.1} parent=55 // pred_fallthru
          _
        // Predicated region
        $region61: #{tpu_custom_call.1} parent=55 // pred_check
          %p434 = pneg %p90
        $region62: #{tpu_custom_call.1} parent=55 // pred_check_branch
          %436 = sbr.rel (%p434) target = $region64
        $region63: #{tpu_custom_call.1} parent=55 // pred_region
          %p437 = scmp.lt.s32.totalorder %s29, 1
          %s438 = scalar_select %p437, %s29, 1
          %p439 = scmp.lt.s32.totalorder %s30, 1
          %s440 = scalar_select %p439, %s30, 1
          %s441 = smul.addr %s438, 2
          %s442 = sadd.s32 %s440, %s441
          %s443 = smul.addr %s442, 4
          %s444 = scalar_lea.vmem %s1, %s443
        $region64: #{tpu_custom_call.1} parent=55 // pred_fallthru
          _
        // Predicated region
        $region65: #{tpu_custom_call.1} parent=55 // pred_check
          %p445 = pneg %p124
        $region66: #{tpu_custom_call.1} parent=55 // pred_check_branch
          %447 = sbr.rel (%p445) target = $region68
        $region67: #{tpu_custom_call.1} parent=55 // pred_region
          %s448 = sadd.s32 %s30, 1
          %p449 = scmp.lt.s32.totalorder %s448, 1
          %s450 = scalar_select %p449, %s448, 1
          %p451 = scmp.lt.s32.totalorder %s29, 1
          %s452 = scalar_select %p451, %s29, 1
          %p453 = scmp.lt.s32.totalorder %s450, 1
          %s454 = scalar_select %p453, %s450, 1
          %s455 = smul.addr %s452, 2
          %s456 = sadd.s32 %s454, %s455
          %s457 = smul.addr %s456, 4
          %s458 = scalar_lea.vmem %s2, %s457
          %s459 = sadd.s32 %s30, 1
          %p460 = scmp.lt.s32.totalorder %s459, 1
          %s461 = scalar_select %p460, %s459, 1
        $region68: #{tpu_custom_call.1} parent=55 // pred_fallthru
          _
      $region56: #{tpu_custom_call.1} parent=5 // pred_fallthru
        _
      %p462 = scmp.le.s32.totalorder 1, %s22
      %p463 = scmp.lt.s32.totalorder %s22, 5
      %p464 = pnand %p462, %p463
      %p465 = pneg %p464
      // Predicated region
      $region69: #{tpu_custom_call.1} parent=5 // pred_check
        _
      $region70: #{tpu_custom_call.1} parent=5 // pred_check_branch
        %467 = sbr.rel (%p464) target = $region72
      $region71: #{tpu_custom_call.1} parent=5 // pred_region
        %s468 = ssub.s32 %s22, 1
        %s469 = ssub.s32 %s32, 1
        %p470 = scmp.gt.s32.totalorder %s469, 0
        %s471 = scalar_select %p470, %s469, 0
        %p472 = scmp.lt.s32.totalorder %s31, 1
        %s473 = scalar_select %p472, %s31, 1
        %p474 = scmp.lt.s32.totalorder %s471, 1
        %s475 = scalar_select %p474, %s471, 1
        %s476 = smul.addr %s473, 2
        %s477 = sadd.s32 %s475, %s476
        %s478 = smul.addr %s477, 4
        %s479 = scalar_lea.vmem %s0, %s478
        %p480 = pneg %p68
        %p481 = pneg %p65
        %p482 = scmp.lt.s32.totalorder %s31, 1
        %s483 = scalar_select %p482, %s31, 1
        %p484 = scmp.lt.s32.totalorder %s32, 1
        %s485 = scalar_select %p484, %s32, 1
        %s486 = smul.addr %s483, 2
        %s487 = sadd.s32 %s485, %s486
        %s488 = smul.addr %s487, 4
        %s489 = scalar_lea.vmem %s1, %s488
        %p490 = pneg %p96
        %p491 = pneg %p93
        %s492 = sadd.s32 %s32, 1
        %p493 = scmp.lt.s32.totalorder %s492, 1
        %s494 = scalar_select %p493, %s492, 1
        %p495 = scmp.lt.s32.totalorder %s31, 1
        %s496 = scalar_select %p495, %s31, 1
        %p497 = scmp.lt.s32.totalorder %s494, 1
        %s498 = scalar_select %p497, %s494, 1
        %s499 = smul.addr %s496, 2
        %s500 = sadd.s32 %s498, %s499
        %s501 = smul.addr %s500, 4
        %s502 = scalar_lea.vmem %s2, %s501
        %p503 = pneg %p130
        %p504 = pneg %p127
        %p505 = pneg %p151
        %p506 = pneg %p148
        %p507 = pneg %p172
        %p508 = pneg %p169
        %p509 = pneg %p193
        %p510 = pneg %p190
        %p511 = pneg %p214
        %p512 = pneg %p211
        %p513 = pneg %p235
        %p514 = pneg %p232
        %p515 = pneg %p256
        %p516 = pneg %p253
        %p517 = pneg %p277
        %p518 = pneg %p274
        %p519 = pneg %p298
        %p520 = pneg %p295
        %p521 = pneg %p319
        %p522 = pneg %p316
        %p523 = pneg %p340
        %p524 = pneg %p337
        %p525 = pneg %p368
        %p526 = pneg %p365
        %s527 = sand.u32 %s355, 1
        %s528 = scalar_lea.sflag [#allocation4], %s527
        %s529 = sand.u32 %s355, 1
        %s530 = smul.addr %s529, 8
        %s531 = scalar_lea.vmem [#allocation3], %s530
        %s532 = ssub.s32 %s32, 1
        %p533 = scmp.gt.s32.totalorder %s532, 0
        %s534 = scalar_select %p533, %s532, 0
        %p535 = scmp.lt.s32.totalorder %s31, 1
        %s536 = scalar_select %p535, %s31, 1
        %p537 = scmp.lt.s32.totalorder %s534, 1
        %s538 = scalar_select %p537, %s534, 1
        %s539 = smul.addr %s536, 2
        %s540 = sadd.s32 %s538, %s539
        %s541 = smul.addr %s540, 4
        %s542 = scalar_lea.vmem %s0, %s541
        %s543 = ssub.s32 %s32, 1
        %p544 = scmp.gt.s32.totalorder %s543, 0
        %s545 = scalar_select %p544, %s543, 0
        %p546 = scmp.lt.s32.totalorder %s31, 1
        %s547 = scalar_select %p546, %s31, 1
        %p548 = scmp.lt.s32.totalorder %s32, 1
        %s549 = scalar_select %p548, %s32, 1
        %s550 = smul.addr %s547, 2
        %s551 = sadd.s32 %s549, %s550
        %s552 = smul.addr %s551, 4
        %s553 = scalar_lea.vmem %s1, %s552
        %s554 = sadd.s32 %s32, 1
        %p555 = scmp.lt.s32.totalorder %s554, 1
        %s556 = scalar_select %p555, %s554, 1
        %p557 = scmp.lt.s32.totalorder %s31, 1
        %s558 = scalar_select %p557, %s31, 1
        %p559 = scmp.lt.s32.totalorder %s556, 1
        %s560 = scalar_select %p559, %s556, 1
        %s561 = smul.addr %s558, 2
        %s562 = sadd.s32 %s560, %s561
        %s563 = smul.addr %s562, 4
        %s564 = scalar_lea.vmem %s2, %s563
        %s565 = sadd.s32 %s32, 1
        %p566 = scmp.lt.s32.totalorder %s565, 1
        %s567 = scalar_select %p566, %s565, 1
        %v569 = vld [vmem:[%s542] sm:$0xf]
        %v570 = vld [vmem:[%s553] sm:$0xf]
        %v571 = vld [vmem:[%s564] sm:$0xf]
        %573 = vrot.lane.b32.xlu0 %v569, 7
        %v574 = vpop.permute.xlu0 %573
        %577 = vrot.lane.b32.xlu0 %v570, 7
        %v578 = vpop.permute.xlu0 %577
        %581 = vrot.lane.b32.xlu0 %v571, 7
        %v582 = vpop.permute.xlu0 %581
        %vm584 = vcmask 56320
        %v585 = vsel %vm584, %v574, %v578
        %v586 = vsel %vm584, %v578, %v582
        %v587 = vpack.c.bf16 %v585, %v585
        %v588 = vpack.c.bf16 %v586, %v586
        %v589 = vld [vmem:[%s3] sm:$0xf]
        %v590 = vld [vmem:[%s3 + $0x4] sm:$0xf]
        %v591 = vld [vmem:[%s3 + $0x8] sm:$0xf]
        %v592 = vld [vmem:[%s3 + $0xc] sm:$0xf]
        %v593 = vld [vmem:[%s4] sm:$0xff]
        %v594 = vld [vmem:[%s4 + $0x8] sm:$0xff]
        %v595 = vld [vmem:[%s4 + $0x10] sm:$0xff]
        %v596 = vld [vmem:[%s4 + $0x18] sm:$0xff]
        %598 = vset.pattern.permute.xlu0 0
        %599 = vperm.xlu0 %598, %v593
        %v600 = vpop.permute.xlu0 %599
        %603 = vset.pattern.permute.xlu0 0
        %604 = vperm.xlu0 %603, %v594
        %v605 = vpop.permute.xlu0 %604
        %608 = vset.pattern.permute.xlu0 0
        %609 = vperm.xlu0 %608, %v595
        %v610 = vpop.permute.xlu0 %609
        %613 = vset.pattern.permute.xlu0 0
        %614 = vperm.xlu0 %613, %v596
        %v615 = vpop.permute.xlu0 %614
        %v621 = vunpack.c.l.b16 %v589
        %v622 = vunpack.c.l.b16 %v590
        %v623 = vunpack.c.l.b16 %v591
        %v624 = vunpack.c.l.b16 %v592
        %v625 = vpack.c.b16 %v622, %v621
        %v626 = vpack.c.b16 %v624, %v623
        %vm627 = vcmask 31744
        %v629 = vsel %vm627, %v625, 0
        %v632 = vsel %vm627, %v626, 0
        %vm634 = vcmask 1041408
        %v636 = vsel %vm634, %v587, 0
        %v639 = vsel %vm634, %v588, 0
        %641 = vmatprep.subr.bf16.mxu0 %v639
        %642 = vmatpush1.bf16.msra.mxu0 %v636
        %643 = vmatprep.subr.bf16.mxu0 0
        %644 = vmatpush1.bf16.msra.mxu0 0
        %645 = vmatprep.subr.bf16.mxu0 0
        %646 = vmatpush1.bf16.msra.mxu0 0
        %647 = vmatprep.subr.bf16.mxu0 0
        %648 = vmatpush1.bf16.msra.mxu0 0
        %649 = vmatprep.subr.bf16.mxu0 0
        %650 = vmatpush1.bf16.msra.mxu0 0
        %651 = vmatprep.subr.bf16.mxu0 0
        %652 = vmatpush1.bf16.msra.mxu0 0
        %653 = vmatprep.subr.bf16.mxu0 0
        %654 = vmatpush1.bf16.msra.mxu0 0
        %655 = vmatprep.subr.bf16.mxu0 0
        %656 = vmatpush1.bf16.msra.mxu0 0
        %657 = vmatprep.subr.bf16.mxu0 0
        %658 = vmatpush1.bf16.msra.mxu0 0
        %659 = vmatprep.subr.bf16.mxu0 0
        %660 = vmatpush1.bf16.msra.mxu0 0
        %661 = vmatprep.subr.bf16.mxu0 0
        %662 = vmatpush1.bf16.msra.mxu0 0
        %663 = vmatprep.subr.bf16.mxu0 0
        %664 = vmatpush1.bf16.msra.mxu0 0
        %665 = vmatprep.subr.bf16.mxu0 0
        %666 = vmatpush1.bf16.msra.mxu0 0
        %667 = vmatprep.subr.bf16.mxu0 0
        %668 = vmatpush1.bf16.msra.mxu0 0
        %669 = vmatprep.subr.bf16.mxu0 0
        %670 = vmatpush1.bf16.msra.mxu0 0
        %671 = vmatprep.subr.bf16.mxu0 0
        %672 = vmatpush1.bf16.msra.mxu0 0
        %673 = vmatprep.mubr.bf16.mxu0 0
        %674 = vmatmul.mubr.bf16.gmra.mrb[0].mxu0 %v629
        %v675 = vpop.f32.mrb[0].mxu0
        %v676 = vadd.f32 %v600, %v675
        %v677 = vpop.f32.mrb[0].mxu0
        %v678 = vadd.f32 %v600, %v677
        %v679 = vpop.f32.mrb[0].mxu0
        %v680 = vadd.f32 %v605, %v679
        %v681 = vpop.f32.mrb[0].mxu0
        %v682 = vadd.f32 %v605, %v681
        %683 = vmatprep.mubr.bf16.mxu0 0
        %684 = vmatmul.mubr.bf16.gmra.mrb[0].mxu0 %v632
        %v685 = vpop.f32.mrb[0].mxu0
        %v686 = vadd.f32 %v610, %v685
        %v687 = vpop.f32.mrb[0].mxu0
        %v688 = vadd.f32 %v610, %v687
        %v689 = vpop.f32.mrb[0].mxu0
        %v690 = vadd.f32 %v615, %v689
        %v691 = vpop.f32.mrb[0].mxu0
        %v692 = vadd.f32 %v615, %v691
        %693 = vdwg.mxu0
        %v694 = vlaneseq
        %v695 = vand.u32 %v694, 127
        %v696 = vadd.s32 %v695, 128
        %s697 = smul.u32 %s32, 128
        %s698 = ssub.s32 %s697, 7
        %v699 = vstv %s698
        %v700 = vadd.s32 %v695, %v699
        %v701 = vadd.s32 %v696, %v699
        %vm702 = vcmp.ge.s32.totalorder %v700, 0
        %vm703 = vcmp.ge.s32.totalorder %v701, 0
        %vm704 = vcmp.lt.s32.totalorder %v700, 200
        %vm705 = vcmp.lt.s32.totalorder %v701, 200
        %vm706 = vmand %vm702, %vm704
        %vm707 = vmand %vm703, %vm705
        %708 = vst [vmem:[#allocation2] sm:$0xff] 0
        %709 = vst [vmem:[#allocation2 + $0x8] sm:$0xff] 0
        %vm710 = vcmask 146432
        %711 = vst.msk [vmem:[#allocation2 + $0x10] sm:$0xff] %vm710, 0
        %712 = vst [vmem:[#allocation2 + $0x18] sm:$0xff] 0
        %713 = vst [vmem:[#allocation2 + $0x20] sm:$0xff] 0
        %714 = vst.msk [vmem:[#allocation2 + $0x28] sm:$0xff] %vm710, 0
        %v715 = vsel %vm706, %v676, 0.0
        %v716 = vsel %vm707, %v678, 0.0
        %v717 = vsel %vm706, %v680, 0.0
        %v718 = vsel %vm707, %v682, 0.0
        %v719 = vsel %vm706, %v686, 0.0
        %v720 = vsel %vm707, %v688, 0.0
        %v721 = vsel %vm706, %v690, 0.0
        %v722 = vsel %vm707, %v692, 0.0
        %v723 = vpack.c.bf16 %v717, %v715
        %v724 = vpack.c.bf16 %v718, %v716
        %v725 = vpack.c.bf16 %v721, %v719
        %v726 = vpack.c.bf16 %v722, %v720
        %727 = vst [vmem:[#allocation2 + $0x8] sm:$0xff] %v723
        %vm728 = vcmask 113664
        %729 = vst.msk [vmem:[#allocation2 + $0x10] sm:$0xff] %vm728, %v724
        %730 = vst [vmem:[#allocation2 + $0x20] sm:$0xff] %v725
        %731 = vst.msk [vmem:[#allocation2 + $0x28] sm:$0xff] %vm728, %v726
        %v732 = vld [vmem:[#allocation2] sm:$0xff]
        %v733 = vld [vmem:[#allocation2 + $0x8] sm:$0xff]
        %v734 = vld [vmem:[#allocation2 + $0x10] sm:$0xff]
        %v735 = vld [vmem:[#allocation2 + $0x18] sm:$0xff]
        %v736 = vld [vmem:[#allocation2 + $0x20] sm:$0xff]
        %v737 = vld [vmem:[#allocation2 + $0x28] sm:$0xff]
        %v738 = vld [vmem:[%s5] sm:$0xf]
        %v739 = vld [vmem:[%s5 + $0x4] sm:$0xf]
        %v740 = vld [vmem:[%s5 + $0x8] sm:$0xf]
        %v741 = vld [vmem:[%s5 + $0xc] sm:$0xf]
        %v742 = vld [vmem:[%s6] sm:$0xf]
        %v743 = vld [vmem:[%s6 + $0x4] sm:$0xf]
        %v744 = vld [vmem:[%s6 + $0x8] sm:$0xf]
        %v745 = vld [vmem:[%s6 + $0xc] sm:$0xf]
        %v750 = vunpack.c.l.b16 %v742
        %v751 = vunpack.c.l.b16 %v743
        %v752 = vunpack.c.l.b16 %v744
        %v753 = vunpack.c.l.b16 %v745
        %v754 = vpack.c.b16 %v751, %v750
        %v755 = vpack.c.b16 %v753, %v752
        %vm756 = vcmask 261120
        %v758 = vsel %vm756, %v754, 0
        %v761 = vsel %vm756, %v755, 0
        %763 = vmatprep.subr.bf16.mxu0 %v724
        %764 = vmatpush1.bf16.msra.mxu0 %v723
        %765 = vmatprep.subr.bf16.mxu0 %v726
        %766 = vmatpush1.bf16.msra.mxu0 %v725
        %767 = vmatprep.subr.bf16.mxu0 0
        %768 = vmatpush1.bf16.msra.mxu0 0
        %769 = vmatprep.subr.bf16.mxu0 0
        %770 = vmatpush1.bf16.msra.mxu0 0
        %771 = vmatprep.subr.bf16.mxu0 0
        %772 = vmatpush1.bf16.msra.mxu0 0
        %773 = vmatprep.subr.bf16.mxu0 0
        %774 = vmatpush1.bf16.msra.mxu0 0
        %775 = vmatprep.subr.bf16.mxu0 0
        %776 = vmatpush1.bf16.msra.mxu0 0
        %777 = vmatprep.subr.bf16.mxu0 0
        %778 = vmatpush1.bf16.msra.mxu0 0
        %779 = vmatprep.subr.bf16.mxu0 0
        %780 = vmatpush1.bf16.msra.mxu0 0
        %781 = vmatprep.subr.bf16.mxu0 0
        %782 = vmatpush1.bf16.msra.mxu0 0
        %783 = vmatprep.subr.bf16.mxu0 0
        %784 = vmatpush1.bf16.msra.mxu0 0
        %785 = vmatprep.subr.bf16.mxu0 0
        %786 = vmatpush1.bf16.msra.mxu0 0
        %787 = vmatprep.subr.bf16.mxu0 0
        %788 = vmatpush1.bf16.msra.mxu0 0
        %789 = vmatprep.subr.bf16.mxu0 0
        %790 = vmatpush1.bf16.msra.mxu0 0
        %791 = vmatprep.subr.bf16.mxu0 0
        %792 = vmatpush1.bf16.msra.mxu0 0
        %793 = vmatprep.subr.bf16.mxu0 0
        %794 = vmatpush1.bf16.msra.mxu0 0
        %795 = vmatprep.mubr.bf16.mxu0 0
        %796 = vmatmul.mubr.bf16.gmra.mrb[0].mxu0 %v758
        %v797 = vpop.f32.mrb[0].mxu0
        %v798 = vadd.f32 0.0, %v797
        %v799 = vpop.f32.mrb[0].mxu0
        %v800 = vadd.f32 0.0, %v799
        %v801 = vpop.f32.mrb[0].mxu0
        %v802 = vadd.f32 0.0, %v801
        %v803 = vpop.f32.mrb[0].mxu0
        %v804 = vadd.f32 0.0, %v803
        %805 = vmatprep.mubr.bf16.mxu0 0
        %806 = vmatmul.mubr.bf16.gmra.mrb[0].mxu0 %v761
        %v807 = vpop.f32.mrb[0].mxu0
        %v808 = vadd.f32 0.0, %v807
        %v809 = vpop.f32.mrb[0].mxu0
        %v810 = vadd.f32 0.0, %v809
        %v811 = vpop.f32.mrb[0].mxu0
        %v812 = vadd.f32 0.0, %v811
        %v813 = vpop.f32.mrb[0].mxu0
        %v814 = vadd.f32 0.0, %v813
        %815 = vdwg.mxu0
        %v820 = vunpack.c.l.b16 %v738
        %v821 = vunpack.c.l.b16 %v739
        %v822 = vunpack.c.l.b16 %v740
        %v823 = vunpack.c.l.b16 %v741
        %v824 = vpack.c.b16 %v821, %v820
        %v825 = vpack.c.b16 %v823, %v822
        %832 = vrot.lane.b32.xlu0 %v732, 1
        %v833 = vpop.permute.xlu0 %832
        %834 = vrot.lane.b32.xlu0 %v733, 1
        %v835 = vpop.permute.xlu0 %834
        %836 = vrot.lane.b32.xlu0 %v734, 1
        %v837 = vpop.permute.xlu0 %836
        %838 = vrot.lane.b32.xlu0 %v735, 1
        %v839 = vpop.permute.xlu0 %838
        %840 = vrot.lane.b32.xlu0 %v736, 1
        %v841 = vpop.permute.xlu0 %840
        %842 = vrot.lane.b32.xlu0 %v737, 1
        %v843 = vpop.permute.xlu0 %842
        %vm844 = vcmask 7168
        %v845 = vsel %vm844, %v833, %v835
        %v846 = vsel %vm844, %v835, %v837
        %v847 = vsel %vm844, %v839, %v841
        %v848 = vsel %vm844, %v841, %v843
        %v854 = vsel %vm756, %v824, 0
        %v857 = vsel %vm756, %v825, 0
        %859 = vmatprep.subr.bf16.mxu0 %v846
        %860 = vmatpush1.bf16.msra.mxu0 %v845
        %861 = vmatprep.subr.bf16.mxu0 %v848
        %862 = vmatpush1.bf16.msra.mxu0 %v847
        %863 = vmatprep.subr.bf16.mxu0 0
        %864 = vmatpush1.bf16.msra.mxu0 0
        %865 = vmatprep.subr.bf16.mxu0 0
        %866 = vmatpush1.bf16.msra.mxu0 0
        %867 = vmatprep.subr.bf16.mxu0 0
        %868 = vmatpush1.bf16.msra.mxu0 0
        %869 = vmatprep.subr.bf16.mxu0 0
        %870 = vmatpush1.bf16.msra.mxu0 0
        %871 = vmatprep.subr.bf16.mxu0 0
        %872 = vmatpush1.bf16.msra.mxu0 0
        %873 = vmatprep.subr.bf16.mxu0 0
        %874 = vmatpush1.bf16.msra.mxu0 0
        %875 = vmatprep.subr.bf16.mxu0 0
        %876 = vmatpush1.bf16.msra.mxu0 0
        %877 = vmatprep.subr.bf16.mxu0 0
        %878 = vmatpush1.bf16.msra.mxu0 0
        %879 = vmatprep.subr.bf16.mxu0 0
        %880 = vmatpush1.bf16.msra.mxu0 0
        %881 = vmatprep.subr.bf16.mxu0 0
        %882 = vmatpush1.bf16.msra.mxu0 0
        %883 = vmatprep.subr.bf16.mxu0 0
        %884 = vmatpush1.bf16.msra.mxu0 0
        %885 = vmatprep.subr.bf16.mxu0 0
        %886 = vmatpush1.bf16.msra.mxu0 0
        %887 = vmatprep.subr.bf16.mxu0 0
        %888 = vmatpush1.bf16.msra.mxu0 0
        %889 = vmatprep.subr.bf16.mxu0 0
        %890 = vmatpush1.bf16.msra.mxu0 0
        %891 = vmatprep.mubr.bf16.mxu0 0
        %892 = vmatmul.mubr.bf16.gmra.mrb[0].mxu0 %v854
        %v893 = vpop.f32.mrb[0].mxu0
        %v894 = vadd.f32 %v798, %v893
        %v895 = vpop.f32.mrb[0].mxu0
        %v896 = vadd.f32 %v800, %v895
        %v897 = vpop.f32.mrb[0].mxu0
        %v898 = vadd.f32 %v802, %v897
        %v899 = vpop.f32.mrb[0].mxu0
        %v900 = vadd.f32 %v804, %v899
        %901 = vmatprep.mubr.bf16.mxu0 0
        %902 = vmatmul.mubr.bf16.gmra.mrb[0].mxu0 %v857
        %v903 = vpop.f32.mrb[0].mxu0
        %v904 = vadd.f32 %v808, %v903
        %v905 = vpop.f32.mrb[0].mxu0
        %v906 = vadd.f32 %v810, %v905
        %v907 = vpop.f32.mrb[0].mxu0
        %v908 = vadd.f32 %v812, %v907
        %v909 = vpop.f32.mrb[0].mxu0
        %v910 = vadd.f32 %v814, %v909
        %911 = vdwg.mxu0
        %v912 = vld [vmem:[%s7] sm:$0xf]
        %v913 = vld [vmem:[%s7 + $0x4] sm:$0xf]
        %v914 = vld [vmem:[%s7 + $0x8] sm:$0xf]
        %v915 = vld [vmem:[%s7 + $0xc] sm:$0xf]
        %v920 = vunpack.c.l.b16 %v912
        %v921 = vunpack.c.l.b16 %v913
        %v922 = vunpack.c.l.b16 %v914
        %v923 = vunpack.c.l.b16 %v915
        %v924 = vpack.c.b16 %v921, %v920
        %v925 = vpack.c.b16 %v923, %v922
        %926 = vrot.lane.b32.xlu0 %v733, 127
        %v927 = vpop.permute.xlu0 %926
        %928 = vrot.lane.b32.xlu0 %v734, 127
        %v929 = vpop.permute.xlu0 %928
        %930 = vrot.lane.b32.xlu0 %v736, 127
        %v931 = vpop.permute.xlu0 %930
        %932 = vrot.lane.b32.xlu0 %v737, 127
        %v933 = vpop.permute.xlu0 %932
        %vm934 = vcmask 1039360
        %v935 = vsel %vm934, %v927, %v929
        %v936 = vsel %vm934, %v931, %v933
        %v942 = vsel %vm756, %v924, 0
        %v945 = vsel %vm756, %v925, 0
        %947 = vmatprep.subr.bf16.mxu0 %v929
        %948 = vmatpush1.bf16.msra.mxu0 %v935
        %949 = vmatprep.subr.bf16.mxu0 %v933
        %950 = vmatpush1.bf16.msra.mxu0 %v936
        %951 = vmatprep.subr.bf16.mxu0 0
        %952 = vmatpush1.bf16.msra.mxu0 0
        %953 = vmatprep.subr.bf16.mxu0 0
        %954 = vmatpush1.bf16.msra.mxu0 0
        %955 = vmatprep.subr.bf16.mxu0 0
        %956 = vmatpush1.bf16.msra.mxu0 0
        %957 = vmatprep.subr.bf16.mxu0 0
        %958 = vmatpush1.bf16.msra.mxu0 0
        %959 = vmatprep.subr.bf16.mxu0 0
        %960 = vmatpush1.bf16.msra.mxu0 0
        %961 = vmatprep.subr.bf16.mxu0 0
        %962 = vmatpush1.bf16.msra.mxu0 0
        %963 = vmatprep.subr.bf16.mxu0 0
        %964 = vmatpush1.bf16.msra.mxu0 0
        %965 = vmatprep.subr.bf16.mxu0 0
        %966 = vmatpush1.bf16.msra.mxu0 0
        %967 = vmatprep.subr.bf16.mxu0 0
        %968 = vmatpush1.bf16.msra.mxu0 0
        %969 = vmatprep.subr.bf16.mxu0 0
        %970 = vmatpush1.bf16.msra.mxu0 0
        %971 = vmatprep.subr.bf16.mxu0 0
        %972 = vmatpush1.bf16.msra.mxu0 0
        %973 = vmatprep.subr.bf16.mxu0 0
        %974 = vmatpush1.bf16.msra.mxu0 0
        %975 = vmatprep.subr.bf16.mxu0 0
        %976 = vmatpush1.bf16.msra.mxu0 0
        %977 = vmatprep.subr.bf16.mxu0 0
        %978 = vmatpush1.bf16.msra.mxu0 0
        %979 = vmatprep.mubr.bf16.mxu0 0
        %980 = vmatmul.mubr.bf16.gmra.mrb[0].mxu0 %v942
        %v981 = vpop.f32.mrb[0].mxu0
        %v982 = vadd.f32 0.0, %v981
        %v983 = vpop.f32.mrb[0].mxu0
        %v984 = vadd.f32 0.0, %v983
        %v985 = vpop.f32.mrb[0].mxu0
        %v986 = vadd.f32 0.0, %v985
        %v987 = vpop.f32.mrb[0].mxu0
        %v988 = vadd.f32 0.0, %v987
        %989 = vmatprep.mubr.bf16.mxu0 0
        %990 = vmatmul.mubr.bf16.gmra.mrb[0].mxu0 %v945
        %v991 = vpop.f32.mrb[0].mxu0
        %v992 = vadd.f32 0.0, %v991
        %v993 = vpop.f32.mrb[0].mxu0
        %v994 = vadd.f32 0.0, %v993
        %v995 = vpop.f32.mrb[0].mxu0
        %v996 = vadd.f32 0.0, %v995
        %v997 = vpop.f32.mrb[0].mxu0
        %v998 = vadd.f32 0.0, %v997
        %999 = vdwg.mxu0
        %v1000 = vadd.f32 %v894, %v982
        %v1001 = vadd.f32 %v896, %v984
        %v1002 = vadd.f32 %v898, %v986
        %v1003 = vadd.f32 %v900, %v988
        %v1004 = vadd.f32 %v904, %v992
        %v1005 = vadd.f32 %v906, %v994
        %v1006 = vadd.f32 %v908, %v996
        %v1007 = vadd.f32 %v910, %v998
        %v1008 = vld [vmem:[%s8] sm:$0xff]
        %v1009 = vld [vmem:[%s8 + $0x8] sm:$0xff]
        %v1010 = vld [vmem:[%s8 + $0x10] sm:$0xff]
        %v1011 = vld [vmem:[%s8 + $0x18] sm:$0xff]
        %1013 = vset.pattern.permute.xlu0 0
        %1014 = vperm.xlu0 %1013, %v1008
        %v1015 = vpop.permute.xlu0 %1014
        %1018 = vset.pattern.permute.xlu0 0
        %1019 = vperm.xlu0 %1018, %v1009
        %v1020 = vpop.permute.xlu0 %1019
        %1023 = vset.pattern.permute.xlu0 0
        %1024 = vperm.xlu0 %1023, %v1010
        %v1025 = vpop.permute.xlu0 %1024
        %1028 = vset.pattern.permute.xlu0 0
        %1029 = vperm.xlu0 %1028, %v1011
        %v1030 = vpop.permute.xlu0 %1029
        %v1032 = vadd.f32 %v1000, %v1015
        %v1033 = vadd.f32 %v1001, %v1015
        %v1034 = vadd.f32 %v1002, %v1020
        %v1035 = vadd.f32 %v1003, %v1020
        %v1036 = vadd.f32 %v1004, %v1025
        %v1037 = vadd.f32 %v1005, %v1025
        %v1038 = vadd.f32 %v1006, %v1030
        %v1039 = vadd.f32 %v1007, %v1030
        %v1040 = vmax.f32 %v1032, 0.0
        %v1041 = vmax.f32 %v1033, 0.0
        %v1042 = vmax.f32 %v1034, 0.0
        %v1043 = vmax.f32 %v1035, 0.0
        %v1044 = vmax.f32 %v1036, 0.0
        %v1045 = vmax.f32 %v1037, 0.0
        %v1046 = vmax.f32 %v1038, 0.0
        %v1047 = vmax.f32 %v1039, 0.0
        %v1048 = vld [vmem:[%s9] sm:$0xf]
        %v1049 = vld [vmem:[%s9 + $0x4] sm:$0xf]
        %v1050 = vld [vmem:[%s9 + $0x8] sm:$0xf]
        %v1051 = vld [vmem:[%s9 + $0xc] sm:$0xf]
        %v1052 = vpack.c.bf16 %v1042, %v1040
        %v1053 = vpack.c.bf16 %v1043, %v1041
        %v1054 = vpack.c.bf16 %v1046, %v1044
        %v1055 = vpack.c.bf16 %v1047, %v1045
        %v1056 = vld [vmem:[%s10] sm:$0xff]
        %v1057 = vld [vmem:[%s10 + $0x8] sm:$0xff]
        %v1058 = vld [vmem:[%s10 + $0x10] sm:$0xff]
        %v1059 = vld [vmem:[%s10 + $0x18] sm:$0xff]
        %1061 = vset.pattern.permute.xlu0 0
        %1062 = vperm.xlu0 %1061, %v1056
        %v1063 = vpop.permute.xlu0 %1062
        %1066 = vset.pattern.permute.xlu0 0
        %1067 = vperm.xlu0 %1066, %v1057
        %v1068 = vpop.permute.xlu0 %1067
        %1071 = vset.pattern.permute.xlu0 0
        %1072 = vperm.xlu0 %1071, %v1058
        %v1073 = vpop.permute.xlu0 %1072
        %1076 = vset.pattern.permute.xlu0 0
        %1077 = vperm.xlu0 %1076, %v1059
        %v1078 = vpop.permute.xlu0 %1077
        %v1084 = vunpack.c.l.b16 %v1048
        %v1085 = vunpack.c.l.b16 %v1049
        %v1086 = vunpack.c.l.b16 %v1050
        %v1087 = vunpack.c.l.b16 %v1051
        %v1088 = vpack.c.b16 %v1085, %v1084
        %v1089 = vpack.c.b16 %v1087, %v1086
        %v1091 = vsel %vm756, %v1088, 0
        %v1094 = vsel %vm756, %v1089, 0
        %1096 = vmatprep.subr.bf16.mxu0 %v1053
        %1097 = vmatpush1.bf16.msra.mxu0 %v1052
        %1098 = vmatprep.subr.bf16.mxu0 %v1055
        %1099 = vmatpush1.bf16.msra.mxu0 %v1054
        %1100 = vmatprep.subr.bf16.mxu0 0
        %1101 = vmatpush1.bf16.msra.mxu0 0
        %1102 = vmatprep.subr.bf16.mxu0 0
        %1103 = vmatpush1.bf16.msra.mxu0 0
        %1104 = vmatprep.subr.bf16.mxu0 0
        %1105 = vmatpush1.bf16.msra.mxu0 0
        %1106 = vmatprep.subr.bf16.mxu0 0
        %1107 = vmatpush1.bf16.msra.mxu0 0
        %1108 = vmatprep.subr.bf16.mxu0 0
        %1109 = vmatpush1.bf16.msra.mxu0 0
        %1110 = vmatprep.subr.bf16.mxu0 0
        %1111 = vmatpush1.bf16.msra.mxu0 0
        %1112 = vmatprep.subr.bf16.mxu0 0
        %1113 = vmatpush1.bf16.msra.mxu0 0
        %1114 = vmatprep.subr.bf16.mxu0 0
        %1115 = vmatpush1.bf16.msra.mxu0 0
        %1116 = vmatprep.subr.bf16.mxu0 0
        %1117 = vmatpush1.bf16.msra.mxu0 0
        %1118 = vmatprep.subr.bf16.mxu0 0
        %1119 = vmatpush1.bf16.msra.mxu0 0
        %1120 = vmatprep.subr.bf16.mxu0 0
        %1121 = vmatpush1.bf16.msra.mxu0 0
        %1122 = vmatprep.subr.bf16.mxu0 0
        %1123 = vmatpush1.bf16.msra.mxu0 0
        %1124 = vmatprep.subr.bf16.mxu0 0
        %1125 = vmatpush1.bf16.msra.mxu0 0
        %1126 = vmatprep.subr.bf16.mxu0 0
        %1127 = vmatpush1.bf16.msra.mxu0 0
        %1128 = vmatprep.mubr.bf16.mxu0 0
        %1129 = vmatmul.mubr.bf16.gmra.mrb[0].mxu0 %v1091
        %v1130 = vpop.f32.mrb[0].mxu0
        %v1131 = vadd.f32 %v1063, %v1130
        %v1132 = vpop.f32.mrb[0].mxu0
        %v1133 = vadd.f32 %v1063, %v1132
        %v1134 = vpop.f32.mrb[0].mxu0
        %v1135 = vadd.f32 %v1068, %v1134
        %v1136 = vpop.f32.mrb[0].mxu0
        %v1137 = vadd.f32 %v1068, %v1136
        %1138 = vmatprep.mubr.bf16.mxu0 0
        %1139 = vmatmul.mubr.bf16.gmra.mrb[0].mxu0 %v1094
        %v1140 = vpop.f32.mrb[0].mxu0
        %v1141 = vadd.f32 %v1073, %v1140
        %v1142 = vpop.f32.mrb[0].mxu0
        %v1143 = vadd.f32 %v1073, %v1142
        %v1144 = vpop.f32.mrb[0].mxu0
        %v1145 = vadd.f32 %v1078, %v1144
        %v1146 = vpop.f32.mrb[0].mxu0
        %v1147 = vadd.f32 %v1078, %v1146
        %1148 = vdwg.mxu0
        %v1149 = vadd.f32 %v676, %v1131
        %v1150 = vadd.f32 %v678, %v1133
        %v1151 = vadd.f32 %v680, %v1135
        %v1152 = vadd.f32 %v682, %v1137
        %v1153 = vadd.f32 %v686, %v1141
        %v1154 = vadd.f32 %v688, %v1143
        %v1155 = vadd.f32 %v690, %v1145
        %v1156 = vadd.f32 %v692, %v1147
        %v1157 = vsel %vm706, %v1149, 0.0
        %v1158 = vsel %vm707, %v1150, 0.0
        %v1159 = vsel %vm706, %v1151, 0.0
        %v1160 = vsel %vm707, %v1152, 0.0
        %v1161 = vsel %vm706, %v1153, 0.0
        %v1162 = vsel %vm707, %v1154, 0.0
        %v1163 = vsel %vm706, %v1155, 0.0
        %v1164 = vsel %vm707, %v1156, 0.0
        %v1165 = vpack.c.bf16 %v1159, %v1157
        %v1166 = vpack.c.bf16 %v1160, %v1158
        %v1167 = vpack.c.bf16 %v1163, %v1161
        %v1168 = vpack.c.bf16 %v1164, %v1162
        %1169 = vst [vmem:[#allocation2 + $0x8] sm:$0xff] %v1165
        %1170 = vst.msk [vmem:[#allocation2 + $0x10] sm:$0xff] %vm728, %v1166
        %1171 = vst [vmem:[#allocation2 + $0x20] sm:$0xff] %v1167
        %1172 = vst.msk [vmem:[#allocation2 + $0x28] sm:$0xff] %vm728, %v1168
        %v1173 = vld [vmem:[#allocation2] sm:$0xff]
        %v1174 = vld [vmem:[#allocation2 + $0x8] sm:$0xff]
        %v1175 = vld [vmem:[#allocation2 + $0x10] sm:$0xff]
        %v1176 = vld [vmem:[#allocation2 + $0x18] sm:$0xff]
        %v1177 = vld [vmem:[#allocation2 + $0x20] sm:$0xff]
        %v1178 = vld [vmem:[#allocation2 + $0x28] sm:$0xff]
        %s1179 = scalar_lea.vmem %s5, 16
        %v1180 = vld [vmem:[%s1179] sm:$0xf]
        %v1181 = vld [vmem:[%s1179 + $0x4] sm:$0xf]
        %v1182 = vld [vmem:[%s1179 + $0x8] sm:$0xf]
        %v1183 = vld [vmem:[%s1179 + $0xc] sm:$0xf]
        %s1184 = scalar_lea.vmem %s6, 16
        %v1185 = vld [vmem:[%s1184] sm:$0xf]
        %v1186 = vld [vmem:[%s1184 + $0x4] sm:$0xf]
        %v1187 = vld [vmem:[%s1184 + $0x8] sm:$0xf]
        %v1188 = vld [vmem:[%s1184 + $0xc] sm:$0xf]
        %v1193 = vunpack.c.l.b16 %v1185
        %v1194 = vunpack.c.l.b16 %v1186
        %v1195 = vunpack.c.l.b16 %v1187
        %v1196 = vunpack.c.l.b16 %v1188
        %v1197 = vpack.c.b16 %v1194, %v1193
        %v1198 = vpack.c.b16 %v1196, %v1195
        %v1200 = vsel %vm756, %v1197, 0
        %v1203 = vsel %vm756, %v1198, 0
        %1205 = vmatprep.subr.bf16.mxu0 %v1166
        %1206 = vmatpush1.bf16.msra.mxu0 %v1165
        %1207 = vmatprep.subr.bf16.mxu0 %v1168
        %1208 = vmatpush1.bf16.msra.mxu0 %v1167
        %1209 = vmatprep.subr.bf16.mxu0 0
        %1210 = vmatpush1.bf16.msra.mxu0 0
        %1211 = vmatprep.subr.bf16.mxu0 0
        %1212 = vmatpush1.bf16.msra.mxu0 0
        %1213 = vmatprep.subr.bf16.mxu0 0
        %1214 = vmatpush1.bf16.msra.mxu0 0
        %1215 = vmatprep.subr.bf16.mxu0 0
        %1216 = vmatpush1.bf16.msra.mxu0 0
        %1217 = vmatprep.subr.bf16.mxu0 0
        %1218 = vmatpush1.bf16.msra.mxu0 0
        %1219 = vmatprep.subr.bf16.mxu0 0
        %1220 = vmatpush1.bf16.msra.mxu0 0
        %1221 = vmatprep.subr.bf16.mxu0 0
        %1222 = vmatpush1.bf16.msra.mxu0 0
        %1223 = vmatprep.subr.bf16.mxu0 0
        %1224 = vmatpush1.bf16.msra.mxu0 0
        %1225 = vmatprep.subr.bf16.mxu0 0
        %1226 = vmatpush1.bf16.msra.mxu0 0
        %1227 = vmatprep.subr.bf16.mxu0 0
        %1228 = vmatpush1.bf16.msra.mxu0 0
        %1229 = vmatprep.subr.bf16.mxu0 0
        %1230 = vmatpush1.bf16.msra.mxu0 0
        %1231 = vmatprep.subr.bf16.mxu0 0
        %1232 = vmatpush1.bf16.msra.mxu0 0
        %1233 = vmatprep.subr.bf16.mxu0 0
        %1234 = vmatpush1.bf16.msra.mxu0 0
        %1235 = vmatprep.subr.bf16.mxu0 0
        %1236 = vmatpush1.bf16.msra.mxu0 0
        %1237 = vmatprep.mubr.bf16.mxu0 0
        %1238 = vmatmul.mubr.bf16.gmra.mrb[0].mxu0 %v1200
        %v1239 = vpop.f32.mrb[0].mxu0
        %v1240 = vadd.f32 0.0, %v1239
        %v1241 = vpop.f32.mrb[0].mxu0
        %v1242 = vadd.f32 0.0, %v1241
        %v1243 = vpop.f32.mrb[0].mxu0
        %v1244 = vadd.f32 0.0, %v1243
        %v1245 = vpop.f32.mrb[0].mxu0
        %v1246 = vadd.f32 0.0, %v1245
        %1247 = vmatprep.mubr.bf16.mxu0 0
        %1248 = vmatmul.mubr.bf16.gmra.mrb[0].mxu0 %v1203
        %v1249 = vpop.f32.mrb[0].mxu0
        %v1250 = vadd.f32 0.0, %v1249
        %v1251 = vpop.f32.mrb[0].mxu0
        %v1252 = vadd.f32 0.0, %v1251
        %v1253 = vpop.f32.mrb[0].mxu0
        %v1254 = vadd.f32 0.0, %v1253
        %v1255 = vpop.f32.mrb[0].mxu0
        %v1256 = vadd.f32 0.0, %v1255
        %1257 = vdwg.mxu0
        %v1262 = vunpack.c.l.b16 %v1180
        %v1263 = vunpack.c.l.b16 %v1181
        %v1264 = vunpack.c.l.b16 %v1182
        %v1265 = vunpack.c.l.b16 %v1183
        %v1266 = vpack.c.b16 %v1263, %v1262
        %v1267 = vpack.c.b16 %v1265, %v1264
        %1274 = vrot.lane.b32.xlu0 %v1173, 2
        %v1275 = vpop.permute.xlu0 %1274
        %1276 = vrot.lane.b32.xlu0 %v1174, 2
        %v1277 = vpop.permute.xlu0 %1276
        %1278 = vrot.lane.b32.xlu0 %v1175, 2
        %v1279 = vpop.permute.xlu0 %1278
        %1280 = vrot.lane.b32.xlu0 %v1176, 2
        %v1281 = vpop.permute.xlu0 %1280
        %1282 = vrot.lane.b32.xlu0 %v1177, 2
        %v1283 = vpop.permute.xlu0 %1282
        %1284 = vrot.lane.b32.xlu0 %v1178, 2
        %v1285 = vpop.permute.xlu0 %1284
        %vm1286 = vcmask 15360
        %v1287 = vsel %vm1286, %v1275, %v1277
        %v1288 = vsel %vm1286, %v1277, %v1279
        %v1289 = vsel %vm1286, %v1281, %v1283
        %v1290 = vsel %vm1286, %v1283, %v1285
        %v1296 = vsel %vm756, %v1266, 0
        %v1299 = vsel %vm756, %v1267, 0
        %1301 = vmatprep.subr.bf16.mxu0 %v1288
        %1302 = vmatpush1.bf16.msra.mxu0 %v1287
        %1303 = vmatprep.subr.bf16.mxu0 %v1290
        %1304 = vmatpush1.bf16.msra.mxu0 %v1289
        %1305 = vmatprep.subr.bf16.mxu0 0
        %1306 = vmatpush1.bf16.msra.mxu0 0
        %1307 = vmatprep.subr.bf16.mxu0 0
        %1308 = vmatpush1.bf16.msra.mxu0 0
        %1309 = vmatprep.subr.bf16.mxu0 0
        %1310 = vmatpush1.bf16.msra.mxu0 0
        %1311 = vmatprep.subr.bf16.mxu0 0
        %1312 = vmatpush1.bf16.msra.mxu0 0
        %1313 = vmatprep.subr.bf16.mxu0 0
        %1314 = vmatpush1.bf16.msra.mxu0 0
        %1315 = vmatprep.subr.bf16.mxu0 0
        %1316 = vmatpush1.bf16.msra.mxu0 0
        %1317 = vmatprep.subr.bf16.mxu0 0
        %1318 = vmatpush1.bf16.msra.mxu0 0
        %1319 = vmatprep.subr.bf16.mxu0 0
        %1320 = vmatpush1.bf16.msra.mxu0 0
        %1321 = vmatprep.subr.bf16.mxu0 0
        %1322 = vmatpush1.bf16.msra.mxu0 0
        %1323 = vmatprep.subr.bf16.mxu0 0
        %1324 = vmatpush1.bf16.msra.mxu0 0
        %1325 = vmatprep.subr.bf16.mxu0 0
        %1326 = vmatpush1.bf16.msra.mxu0 0
        %1327 = vmatprep.subr.bf16.mxu0 0
        %1328 = vmatpush1.bf16.msra.mxu0 0
        %1329 = vmatprep.subr.bf16.mxu0 0
        %1330 = vmatpush1.bf16.msra.mxu0 0
        %1331 = vmatprep.subr.bf16.mxu0 0
        %1332 = vmatpush1.bf16.msra.mxu0 0
        %1333 = vmatprep.mubr.bf16.mxu0 0
        %1334 = vmatmul.mubr.bf16.gmra.mrb[0].mxu0 %v1296
        %v1335 = vpop.f32.mrb[0].mxu0
        %v1336 = vadd.f32 %v1240, %v1335
        %v1337 = vpop.f32.mrb[0].mxu0
        %v1338 = vadd.f32 %v1242, %v1337
        %v1339 = vpop.f32.mrb[0].mxu0
        %v1340 = vadd.f32 %v1244, %v1339
        %v1341 = vpop.f32.mrb[0].mxu0
        %v1342 = vadd.f32 %v1246, %v1341
        %1343 = vmatprep.mubr.bf16.mxu0 0
        %1344 = vmatmul.mubr.bf16.gmra.mrb[0].mxu0 %v1299
        %v1345 = vpop.f32.mrb[0].mxu0
        %v1346 = vadd.f32 %v1250, %v1345
        %v1347 = vpop.f32.mrb[0].mxu0
        %v1348 = vadd.f32 %v1252, %v1347
        %v1349 = vpop.f32.mrb[0].mxu0
        %v1350 = vadd.f32 %v1254, %v1349
        %v1351 = vpop.f32.mrb[0].mxu0
        %v1352 = vadd.f32 %v1256, %v1351
        %1353 = vdwg.mxu0
        %s1354 = scalar_lea.vmem %s7, 16
        %v1355 = vld [vmem:[%s1354] sm:$0xf]
        %v1356 = vld [vmem:[%s1354 + $0x4] sm:$0xf]
        %v1357 = vld [vmem:[%s1354 + $0x8] sm:$0xf]
        %v1358 = vld [vmem:[%s1354 + $0xc] sm:$0xf]
        %v1363 = vunpack.c.l.b16 %v1355
        %v1364 = vunpack.c.l.b16 %v1356
        %v1365 = vunpack.c.l.b16 %v1357
        %v1366 = vunpack.c.l.b16 %v1358
        %v1367 = vpack.c.b16 %v1364, %v1363
        %v1368 = vpack.c.b16 %v1366, %v1365
        %1369 = vrot.lane.b32.xlu0 %v1174, 126
        %v1370 = vpop.permute.xlu0 %1369
        %1371 = vrot.lane.b32.xlu0 %v1175, 126
        %v1372 = vpop.permute.xlu0 %1371
        %1373 = vrot.lane.b32.xlu0 %v1177, 126
        %v1374 = vpop.permute.xlu0 %1373
        %1375 = vrot.lane.b32.xlu0 %v1178, 126
        %v1376 = vpop.permute.xlu0 %1375
        %vm1377 = vcmask 1031168
        %v1378 = vsel %vm1377, %v1370, %v1372
        %v1379 = vsel %vm1377, %v1374, %v1376
        %v1385 = vsel %vm756, %v1367, 0
        %v1388 = vsel %vm756, %v1368, 0
        %1390 = vmatprep.subr.bf16.mxu0 %v1372
        %1391 = vmatpush1.bf16.msra.mxu0 %v1378
        %1392 = vmatprep.subr.bf16.mxu0 %v1376
        %1393 = vmatpush1.bf16.msra.mxu0 %v1379
        %1394 = vmatprep.subr.bf16.mxu0 0
        %1395 = vmatpush1.bf16.msra.mxu0 0
        %1396 = vmatprep.subr.bf16.mxu0 0
        %1397 = vmatpush1.bf16.msra.mxu0 0
        %1398 = vmatprep.subr.bf16.mxu0 0
        %1399 = vmatpush1.bf16.msra.mxu0 0
        %1400 = vmatprep.subr.bf16.mxu0 0
        %1401 = vmatpush1.bf16.msra.mxu0 0
        %1402 = vmatprep.subr.bf16.mxu0 0
        %1403 = vmatpush1.bf16.msra.mxu0 0
        %1404 = vmatprep.subr.bf16.mxu0 0
        %1405 = vmatpush1.bf16.msra.mxu0 0
        %1406 = vmatprep.subr.bf16.mxu0 0
        %1407 = vmatpush1.bf16.msra.mxu0 0
        %1408 = vmatprep.subr.bf16.mxu0 0
        %1409 = vmatpush1.bf16.msra.mxu0 0
        %1410 = vmatprep.subr.bf16.mxu0 0
        %1411 = vmatpush1.bf16.msra.mxu0 0
        %1412 = vmatprep.subr.bf16.mxu0 0
        %1413 = vmatpush1.bf16.msra.mxu0 0
        %1414 = vmatprep.subr.bf16.mxu0 0
        %1415 = vmatpush1.bf16.msra.mxu0 0
        %1416 = vmatprep.subr.bf16.mxu0 0
        %1417 = vmatpush1.bf16.msra.mxu0 0
        %1418 = vmatprep.subr.bf16.mxu0 0
        %1419 = vmatpush1.bf16.msra.mxu0 0
        %1420 = vmatprep.subr.bf16.mxu0 0
        %1421 = vmatpush1.bf16.msra.mxu0 0
        %1422 = vmatprep.mubr.bf16.mxu0 0
        %1423 = vmatmul.mubr.bf16.gmra.mrb[0].mxu0 %v1385
        %v1424 = vpop.f32.mrb[0].mxu0
        %v1425 = vadd.f32 0.0, %v1424
        %v1426 = vpop.f32.mrb[0].mxu0
        %v1427 = vadd.f32 0.0, %v1426
        %v1428 = vpop.f32.mrb[0].mxu0
        %v1429 = vadd.f32 0.0, %v1428
        %v1430 = vpop.f32.mrb[0].mxu0
        %v1431 = vadd.f32 0.0, %v1430
        %1432 = vmatprep.mubr.bf16.mxu0 0
        %1433 = vmatmul.mubr.bf16.gmra.mrb[0].mxu0 %v1388
        %v1434 = vpop.f32.mrb[0].mxu0
        %v1435 = vadd.f32 0.0, %v1434
        %v1436 = vpop.f32.mrb[0].mxu0
        %v1437 = vadd.f32 0.0, %v1436
        %v1438 = vpop.f32.mrb[0].mxu0
        %v1439 = vadd.f32 0.0, %v1438
        %v1440 = vpop.f32.mrb[0].mxu0
        %v1441 = vadd.f32 0.0, %v1440
        %1442 = vdwg.mxu0
        %v1443 = vadd.f32 %v1336, %v1425
        %v1444 = vadd.f32 %v1338, %v1427
        %v1445 = vadd.f32 %v1340, %v1429
        %v1446 = vadd.f32 %v1342, %v1431
        %v1447 = vadd.f32 %v1346, %v1435
        %v1448 = vadd.f32 %v1348, %v1437
        %v1449 = vadd.f32 %v1350, %v1439
        %v1450 = vadd.f32 %v1352, %v1441
        %s1451 = scalar_lea.vmem %s8, 32
        %v1452 = vld [vmem:[%s1451] sm:$0xff]
        %v1453 = vld [vmem:[%s1451 + $0x8] sm:$0xff]
        %v1454 = vld [vmem:[%s1451 + $0x10] sm:$0xff]
        %v1455 = vld [vmem:[%s1451 + $0x18] sm:$0xff]
        %1457 = vset.pattern.permute.xlu0 0
        %1458 = vperm.xlu0 %1457, %v1452
        %v1459 = vpop.permute.xlu0 %1458
        %1462 = vset.pattern.permute.xlu0 0
        %1463 = vperm.xlu0 %1462, %v1453
        %v1464 = vpop.permute.xlu0 %1463
        %1467 = vset.pattern.permute.xlu0 0
        %1468 = vperm.xlu0 %1467, %v1454
        %v1469 = vpop.permute.xlu0 %1468
        %1472 = vset.pattern.permute.xlu0 0
        %1473 = vperm.xlu0 %1472, %v1455
        %v1474 = vpop.permute.xlu0 %1473
        %v1476 = vadd.f32 %v1443, %v1459
        %v1477 = vadd.f32 %v1444, %v1459
        %v1478 = vadd.f32 %v1445, %v1464
        %v1479 = vadd.f32 %v1446, %v1464
        %v1480 = vadd.f32 %v1447, %v1469
        %v1481 = vadd.f32 %v1448, %v1469
        %v1482 = vadd.f32 %v1449, %v1474
        %v1483 = vadd.f32 %v1450, %v1474
        %v1484 = vmax.f32 %v1476, 0.0
        %v1485 = vmax.f32 %v1477, 0.0
        %v1486 = vmax.f32 %v1478, 0.0
        %v1487 = vmax.f32 %v1479, 0.0
        %v1488 = vmax.f32 %v1480, 0.0
        %v1489 = vmax.f32 %v1481, 0.0
        %v1490 = vmax.f32 %v1482, 0.0
        %v1491 = vmax.f32 %v1483, 0.0
        %s1492 = scalar_lea.vmem %s9, 16
        %v1493 = vld [vmem:[%s1492] sm:$0xf]
        %v1494 = vld [vmem:[%s1492 + $0x4] sm:$0xf]
        %v1495 = vld [vmem:[%s1492 + $0x8] sm:$0xf]
        %v1496 = vld [vmem:[%s1492 + $0xc] sm:$0xf]
        %v1497 = vpack.c.bf16 %v1486, %v1484
        %v1498 = vpack.c.bf16 %v1487, %v1485
        %v1499 = vpack.c.bf16 %v1490, %v1488
        %v1500 = vpack.c.bf16 %v1491, %v1489
        %s1501 = scalar_lea.vmem %s10, 32
        %v1502 = vld [vmem:[%s1501] sm:$0xff]
        %v1503 = vld [vmem:[%s1501 + $0x8] sm:$0xff]
        %v1504 = vld [vmem:[%s1501 + $0x10] sm:$0xff]
        %v1505 = vld [vmem:[%s1501 + $0x18] sm:$0xff]
        %1507 = vset.pattern.permute.xlu0 0
        %1508 = vperm.xlu0 %1507, %v1502
        %v1509 = vpop.permute.xlu0 %1508
        %1512 = vset.pattern.permute.xlu0 0
        %1513 = vperm.xlu0 %1512, %v1503
        %v1514 = vpop.permute.xlu0 %1513
        %1517 = vset.pattern.permute.xlu0 0
        %1518 = vperm.xlu0 %1517, %v1504
        %v1519 = vpop.permute.xlu0 %1518
        %1522 = vset.pattern.permute.xlu0 0
        %1523 = vperm.xlu0 %1522, %v1505
        %v1524 = vpop.permute.xlu0 %1523
        %v1530 = vunpack.c.l.b16 %v1493
        %v1531 = vunpack.c.l.b16 %v1494
        %v1532 = vunpack.c.l.b16 %v1495
        %v1533 = vunpack.c.l.b16 %v1496
        %v1534 = vpack.c.b16 %v1531, %v1530
        %v1535 = vpack.c.b16 %v1533, %v1532
        %v1537 = vsel %vm756, %v1534, 0
        %v1540 = vsel %vm756, %v1535, 0
        %1542 = vmatprep.subr.bf16.mxu0 %v1498
        %1543 = vmatpush1.bf16.msra.mxu0 %v1497
        %1544 = vmatprep.subr.bf16.mxu0 %v1500
        %1545 = vmatpush1.bf16.msra.mxu0 %v1499
        %1546 = vmatprep.subr.bf16.mxu0 0
        %1547 = vmatpush1.bf16.msra.mxu0 0
        %1548 = vmatprep.subr.bf16.mxu0 0
        %1549 = vmatpush1.bf16.msra.mxu0 0
        %1550 = vmatprep.subr.bf16.mxu0 0
        %1551 = vmatpush1.bf16.msra.mxu0 0
        %1552 = vmatprep.subr.bf16.mxu0 0
        %1553 = vmatpush1.bf16.msra.mxu0 0
        %1554 = vmatprep.subr.bf16.mxu0 0
        %1555 = vmatpush1.bf16.msra.mxu0 0
        %1556 = vmatprep.subr.bf16.mxu0 0
        %1557 = vmatpush1.bf16.msra.mxu0 0
        %1558 = vmatprep.subr.bf16.mxu0 0
        %1559 = vmatpush1.bf16.msra.mxu0 0
        %1560 = vmatprep.subr.bf16.mxu0 0
        %1561 = vmatpush1.bf16.msra.mxu0 0
        %1562 = vmatprep.subr.bf16.mxu0 0
        %1563 = vmatpush1.bf16.msra.mxu0 0
        %1564 = vmatprep.subr.bf16.mxu0 0
        %1565 = vmatpush1.bf16.msra.mxu0 0
        %1566 = vmatprep.subr.bf16.mxu0 0
        %1567 = vmatpush1.bf16.msra.mxu0 0
        %1568 = vmatprep.subr.bf16.mxu0 0
        %1569 = vmatpush1.bf16.msra.mxu0 0
        %1570 = vmatprep.subr.bf16.mxu0 0
        %1571 = vmatpush1.bf16.msra.mxu0 0
        %1572 = vmatprep.subr.bf16.mxu0 0
        %1573 = vmatpush1.bf16.msra.mxu0 0
        %1574 = vmatprep.mubr.bf16.mxu0 0
        %1575 = vmatmul.mubr.bf16.gmra.mrb[0].mxu0 %v1537
        %v1576 = vpop.f32.mrb[0].mxu0
        %v1577 = vadd.f32 %v1509, %v1576
        %v1578 = vpop.f32.mrb[0].mxu0
        %v1579 = vadd.f32 %v1509, %v1578
        %v1580 = vpop.f32.mrb[0].mxu0
        %v1581 = vadd.f32 %v1514, %v1580
        %v1582 = vpop.f32.mrb[0].mxu0
        %v1583 = vadd.f32 %v1514, %v1582
        %1584 = vmatprep.mubr.bf16.mxu0 0
        %1585 = vmatmul.mubr.bf16.gmra.mrb[0].mxu0 %v1540
        %v1586 = vpop.f32.mrb[0].mxu0
        %v1587 = vadd.f32 %v1519, %v1586
        %v1588 = vpop.f32.mrb[0].mxu0
        %v1589 = vadd.f32 %v1519, %v1588
        %v1590 = vpop.f32.mrb[0].mxu0
        %v1591 = vadd.f32 %v1524, %v1590
        %v1592 = vpop.f32.mrb[0].mxu0
        %v1593 = vadd.f32 %v1524, %v1592
        %1594 = vdwg.mxu0
        %v1595 = vadd.f32 %v1149, %v1577
        %v1596 = vadd.f32 %v1150, %v1579
        %v1597 = vadd.f32 %v1151, %v1581
        %v1598 = vadd.f32 %v1152, %v1583
        %v1599 = vadd.f32 %v1153, %v1587
        %v1600 = vadd.f32 %v1154, %v1589
        %v1601 = vadd.f32 %v1155, %v1591
        %v1602 = vadd.f32 %v1156, %v1593
        %v1603 = vsel %vm706, %v1595, 0.0
        %v1604 = vsel %vm707, %v1596, 0.0
        %v1605 = vsel %vm706, %v1597, 0.0
        %v1606 = vsel %vm707, %v1598, 0.0
        %v1607 = vsel %vm706, %v1599, 0.0
        %v1608 = vsel %vm707, %v1600, 0.0
        %v1609 = vsel %vm706, %v1601, 0.0
        %v1610 = vsel %vm707, %v1602, 0.0
        %v1611 = vpack.c.bf16 %v1605, %v1603
        %v1612 = vpack.c.bf16 %v1606, %v1604
        %v1613 = vpack.c.bf16 %v1609, %v1607
        %v1614 = vpack.c.bf16 %v1610, %v1608
        %1615 = vst [vmem:[#allocation2 + $0x8] sm:$0xff] %v1611
        %1616 = vst.msk [vmem:[#allocation2 + $0x10] sm:$0xff] %vm728, %v1612
        %1617 = vst [vmem:[#allocation2 + $0x20] sm:$0xff] %v1613
        %1618 = vst.msk [vmem:[#allocation2 + $0x28] sm:$0xff] %vm728, %v1614
        %v1619 = vld [vmem:[#allocation2] sm:$0xff]
        %v1620 = vld [vmem:[#allocation2 + $0x8] sm:$0xff]
        %v1621 = vld [vmem:[#allocation2 + $0x10] sm:$0xff]
        %v1622 = vld [vmem:[#allocation2 + $0x18] sm:$0xff]
        %v1623 = vld [vmem:[#allocation2 + $0x20] sm:$0xff]
        %v1624 = vld [vmem:[#allocation2 + $0x28] sm:$0xff]
        %s1625 = scalar_lea.vmem %s5, 32
        %v1626 = vld [vmem:[%s1625] sm:$0xf]
        %v1627 = vld [vmem:[%s1625 + $0x4] sm:$0xf]
        %v1628 = vld [vmem:[%s1625 + $0x8] sm:$0xf]
        %v1629 = vld [vmem:[%s1625 + $0xc] sm:$0xf]
        %s1630 = scalar_lea.vmem %s6, 32
        %v1631 = vld [vmem:[%s1630] sm:$0xf]
        %v1632 = vld [vmem:[%s1630 + $0x4] sm:$0xf]
        %v1633 = vld [vmem:[%s1630 + $0x8] sm:$0xf]
        %v1634 = vld [vmem:[%s1630 + $0xc] sm:$0xf]
        %v1639 = vunpack.c.l.b16 %v1631
        %v1640 = vunpack.c.l.b16 %v1632
        %v1641 = vunpack.c.l.b16 %v1633
        %v1642 = vunpack.c.l.b16 %v1634
        %v1643 = vpack.c.b16 %v1640, %v1639
        %v1644 = vpack.c.b16 %v1642, %v1641
        %v1646 = vsel %vm756, %v1643, 0
        %v1649 = vsel %vm756, %v1644, 0
        %1651 = vmatprep.subr.bf16.mxu0 %v1612
        %1652 = vmatpush1.bf16.msra.mxu0 %v1611
        %1653 = vmatprep.subr.bf16.mxu0 %v1614
        %1654 = vmatpush1.bf16.msra.mxu0 %v1613
        %1655 = vmatprep.subr.bf16.mxu0 0
        %1656 = vmatpush1.bf16.msra.mxu0 0
        %1657 = vmatprep.subr.bf16.mxu0 0
        %1658 = vmatpush1.bf16.msra.mxu0 0
        %1659 = vmatprep.subr.bf16.mxu0 0
        %1660 = vmatpush1.bf16.msra.mxu0 0
        %1661 = vmatprep.subr.bf16.mxu0 0
        %1662 = vmatpush1.bf16.msra.mxu0 0
        %1663 = vmatprep.subr.bf16.mxu0 0
        %1664 = vmatpush1.bf16.msra.mxu0 0
        %1665 = vmatprep.subr.bf16.mxu0 0
        %1666 = vmatpush1.bf16.msra.mxu0 0
        %1667 = vmatprep.subr.bf16.mxu0 0
        %1668 = vmatpush1.bf16.msra.mxu0 0
        %1669 = vmatprep.subr.bf16.mxu0 0
        %1670 = vmatpush1.bf16.msra.mxu0 0
        %1671 = vmatprep.subr.bf16.mxu0 0
        %1672 = vmatpush1.bf16.msra.mxu0 0
        %1673 = vmatprep.subr.bf16.mxu0 0
        %1674 = vmatpush1.bf16.msra.mxu0 0
        %1675 = vmatprep.subr.bf16.mxu0 0
        %1676 = vmatpush1.bf16.msra.mxu0 0
        %1677 = vmatprep.subr.bf16.mxu0 0
        %1678 = vmatpush1.bf16.msra.mxu0 0
        %1679 = vmatprep.subr.bf16.mxu0 0
        %1680 = vmatpush1.bf16.msra.mxu0 0
        %1681 = vmatprep.subr.bf16.mxu0 0
        %1682 = vmatpush1.bf16.msra.mxu0 0
        %1683 = vmatprep.mubr.bf16.mxu0 0
        %1684 = vmatmul.mubr.bf16.gmra.mrb[0].mxu0 %v1646
        %v1685 = vpop.f32.mrb[0].mxu0
        %v1686 = vadd.f32 0.0, %v1685
        %v1687 = vpop.f32.mrb[0].mxu0
        %v1688 = vadd.f32 0.0, %v1687
        %v1689 = vpop.f32.mrb[0].mxu0
        %v1690 = vadd.f32 0.0, %v1689
        %v1691 = vpop.f32.mrb[0].mxu0
        %v1692 = vadd.f32 0.0, %v1691
        %1693 = vmatprep.mubr.bf16.mxu0 0
        %1694 = vmatmul.mubr.bf16.gmra.mrb[0].mxu0 %v1649
        %v1695 = vpop.f32.mrb[0].mxu0
        %v1696 = vadd.f32 0.0, %v1695
        %v1697 = vpop.f32.mrb[0].mxu0
        %v1698 = vadd.f32 0.0, %v1697
        %v1699 = vpop.f32.mrb[0].mxu0
        %v1700 = vadd.f32 0.0, %v1699
        %v1701 = vpop.f32.mrb[0].mxu0
        %v1702 = vadd.f32 0.0, %v1701
        %1703 = vdwg.mxu0
        %v1708 = vunpack.c.l.b16 %v1626
        %v1709 = vunpack.c.l.b16 %v1627
        %v1710 = vunpack.c.l.b16 %v1628
        %v1711 = vunpack.c.l.b16 %v1629
        %v1712 = vpack.c.b16 %v1709, %v1708
        %v1713 = vpack.c.b16 %v1711, %v1710
        %1720 = vrot.lane.b32.xlu0 %v1619, 4
        %v1721 = vpop.permute.xlu0 %1720
        %1722 = vrot.lane.b32.xlu0 %v1620, 4
        %v1723 = vpop.permute.xlu0 %1722
        %1724 = vrot.lane.b32.xlu0 %v1621, 4
        %v1725 = vpop.permute.xlu0 %1724
        %1726 = vrot.lane.b32.xlu0 %v1622, 4
        %v1727 = vpop.permute.xlu0 %1726
        %1728 = vrot.lane.b32.xlu0 %v1623, 4
        %v1729 = vpop.permute.xlu0 %1728
        %1730 = vrot.lane.b32.xlu0 %v1624, 4
        %v1731 = vpop.permute.xlu0 %1730
        %vm1732 = vcmask 31744
        %v1733 = vsel %vm1732, %v1721, %v1723
        %v1734 = vsel %vm1732, %v1723, %v1725
        %v1735 = vsel %vm1732, %v1727, %v1729
        %v1736 = vsel %vm1732, %v1729, %v1731
        %v1742 = vsel %vm756, %v1712, 0
        %v1745 = vsel %vm756, %v1713, 0
        %1747 = vmatprep.subr.bf16.mxu0 %v1734
        %1748 = vmatpush1.bf16.msra.mxu0 %v1733
        %1749 = vmatprep.subr.bf16.mxu0 %v1736
        %1750 = vmatpush1.bf16.msra.mxu0 %v1735
        %1751 = vmatprep.subr.bf16.mxu0 0
        %1752 = vmatpush1.bf16.msra.mxu0 0
        %1753 = vmatprep.subr.bf16.mxu0 0
        %1754 = vmatpush1.bf16.msra.mxu0 0
        %1755 = vmatprep.subr.bf16.mxu0 0
        %1756 = vmatpush1.bf16.msra.mxu0 0
        %1757 = vmatprep.subr.bf16.mxu0 0
        %1758 = vmatpush1.bf16.msra.mxu0 0
        %1759 = vmatprep.subr.bf16.mxu0 0
        %1760 = vmatpush1.bf16.msra.mxu0 0
        %1761 = vmatprep.subr.bf16.mxu0 0
        %1762 = vmatpush1.bf16.msra.mxu0 0
        %1763 = vmatprep.subr.bf16.mxu0 0
        %1764 = vmatpush1.bf16.msra.mxu0 0
        %1765 = vmatprep.subr.bf16.mxu0 0
        %1766 = vmatpush1.bf16.msra.mxu0 0
        %1767 = vmatprep.subr.bf16.mxu0 0
        %1768 = vmatpush1.bf16.msra.mxu0 0
        %1769 = vmatprep.subr.bf16.mxu0 0
        %1770 = vmatpush1.bf16.msra.mxu0 0
        %1771 = vmatprep.subr.bf16.mxu0 0
        %1772 = vmatpush1.bf16.msra.mxu0 0
        %1773 = vmatprep.subr.bf16.mxu0 0
        %1774 = vmatpush1.bf16.msra.mxu0 0
        %1775 = vmatprep.subr.bf16.mxu0 0
        %1776 = vmatpush1.bf16.msra.mxu0 0
        %1777 = vmatprep.subr.bf16.mxu0 0
        %1778 = vmatpush1.bf16.msra.mxu0 0
        %1779 = vmatprep.mubr.bf16.mxu0 0
        %1780 = vmatmul.mubr.bf16.gmra.mrb[0].mxu0 %v1742
        %v1781 = vpop.f32.mrb[0].mxu0
        %v1782 = vadd.f32 %v1686, %v1781
        %v1783 = vpop.f32.mrb[0].mxu0
        %v1784 = vadd.f32 %v1688, %v1783
        %v1785 = vpop.f32.mrb[0].mxu0
        %v1786 = vadd.f32 %v1690, %v1785
        %v1787 = vpop.f32.mrb[0].mxu0
        %v1788 = vadd.f32 %v1692, %v1787
        %1789 = vmatprep.mubr.bf16.mxu0 0
        %1790 = vmatmul.mubr.bf16.gmra.mrb[0].mxu0 %v1745
        %v1791 = vpop.f32.mrb[0].mxu0
        %v1792 = vadd.f32 %v1696, %v1791
        %v1793 = vpop.f32.mrb[0].mxu0
        %v1794 = vadd.f32 %v1698, %v1793
        %v1795 = vpop.f32.mrb[0].mxu0
        %v1796 = vadd.f32 %v1700, %v1795
        %v1797 = vpop.f32.mrb[0].mxu0
        %v1798 = vadd.f32 %v1702, %v1797
        %1799 = vdwg.mxu0
        %s1800 = scalar_lea.vmem %s7, 32
        %v1801 = vld [vmem:[%s1800] sm:$0xf]
        %v1802 = vld [vmem:[%s1800 + $0x4] sm:$0xf]
        %v1803 = vld [vmem:[%s1800 + $0x8] sm:$0xf]
        %v1804 = vld [vmem:[%s1800 + $0xc] sm:$0xf]
        %v1809 = vunpack.c.l.b16 %v1801
        %v1810 = vunpack.c.l.b16 %v1802
        %v1811 = vunpack.c.l.b16 %v1803
        %v1812 = vunpack.c.l.b16 %v1804
        %v1813 = vpack.c.b16 %v1810, %v1809
        %v1814 = vpack.c.b16 %v1812, %v1811
        %1815 = vrot.lane.b32.xlu0 %v1620, 124
        %v1816 = vpop.permute.xlu0 %1815
        %1817 = vrot.lane.b32.xlu0 %v1621, 124
        %v1818 = vpop.permute.xlu0 %1817
        %1819 = vrot.lane.b32.xlu0 %v1623, 124
        %v1820 = vpop.permute.xlu0 %1819
        %1821 = vrot.lane.b32.xlu0 %v1624, 124
        %v1822 = vpop.permute.xlu0 %1821
        %vm1823 = vcmask 1014784
        %v1824 = vsel %vm1823, %v1816, %v1818
        %v1825 = vsel %vm1823, %v1820, %v1822
        %v1831 = vsel %vm756, %v1813, 0
        %v1834 = vsel %vm756, %v1814, 0
        %1836 = vmatprep.subr.bf16.mxu0 %v1818
        %1837 = vmatpush1.bf16.msra.mxu0 %v1824
        %1838 = vmatprep.subr.bf16.mxu0 %v1822
        %1839 = vmatpush1.bf16.msra.mxu0 %v1825
        %1840 = vmatprep.subr.bf16.mxu0 0
        %1841 = vmatpush1.bf16.msra.mxu0 0
        %1842 = vmatprep.subr.bf16.mxu0 0
        %1843 = vmatpush1.bf16.msra.mxu0 0
        %1844 = vmatprep.subr.bf16.mxu0 0
        %1845 = vmatpush1.bf16.msra.mxu0 0
        %1846 = vmatprep.subr.bf16.mxu0 0
        %1847 = vmatpush1.bf16.msra.mxu0 0
        %1848 = vmatprep.subr.bf16.mxu0 0
        %1849 = vmatpush1.bf16.msra.mxu0 0
        %1850 = vmatprep.subr.bf16.mxu0 0
        %1851 = vmatpush1.bf16.msra.mxu0 0
        %1852 = vmatprep.subr.bf16.mxu0 0
        %1853 = vmatpush1.bf16.msra.mxu0 0
        %1854 = vmatprep.subr.bf16.mxu0 0
        %1855 = vmatpush1.bf16.msra.mxu0 0
        %1856 = vmatprep.subr.bf16.mxu0 0
        %1857 = vmatpush1.bf16.msra.mxu0 0
        %1858 = vmatprep.subr.bf16.mxu0 0
        %1859 = vmatpush1.bf16.msra.mxu0 0
        %1860 = vmatprep.subr.bf16.mxu0 0
        %1861 = vmatpush1.bf16.msra.mxu0 0
        %1862 = vmatprep.subr.bf16.mxu0 0
        %1863 = vmatpush1.bf16.msra.mxu0 0
        %1864 = vmatprep.subr.bf16.mxu0 0
        %1865 = vmatpush1.bf16.msra.mxu0 0
        %1866 = vmatprep.subr.bf16.mxu0 0
        %1867 = vmatpush1.bf16.msra.mxu0 0
        %1868 = vmatprep.mubr.bf16.mxu0 0
        %1869 = vmatmul.mubr.bf16.gmra.mrb[0].mxu0 %v1831
        %v1870 = vpop.f32.mrb[0].mxu0
        %v1871 = vadd.f32 0.0, %v1870
        %v1872 = vpop.f32.mrb[0].mxu0
        %v1873 = vadd.f32 0.0, %v1872
        %v1874 = vpop.f32.mrb[0].mxu0
        %v1875 = vadd.f32 0.0, %v1874
        %v1876 = vpop.f32.mrb[0].mxu0
        %v1877 = vadd.f32 0.0, %v1876
        %1878 = vmatprep.mubr.bf16.mxu0 0
        %1879 = vmatmul.mubr.bf16.gmra.mrb[0].mxu0 %v1834
        %v1880 = vpop.f32.mrb[0].mxu0
        %v1881 = vadd.f32 0.0, %v1880
        %v1882 = vpop.f32.mrb[0].mxu0
        %v1883 = vadd.f32 0.0, %v1882
        %v1884 = vpop.f32.mrb[0].mxu0
        %v1885 = vadd.f32 0.0, %v1884
        %v1886 = vpop.f32.mrb[0].mxu0
        %v1887 = vadd.f32 0.0, %v1886
        %1888 = vdwg.mxu0
        %v1889 = vadd.f32 %v1782, %v1871
        %v1890 = vadd.f32 %v1784, %v1873
        %v1891 = vadd.f32 %v1786, %v1875
        %v1892 = vadd.f32 %v1788, %v1877
        %v1893 = vadd.f32 %v1792, %v1881
        %v1894 = vadd.f32 %v1794, %v1883
        %v1895 = vadd.f32 %v1796, %v1885
        %v1896 = vadd.f32 %v1798, %v1887
        %s1897 = scalar_lea.vmem %s8, 64
        %v1898 = vld [vmem:[%s1897] sm:$0xff]
        %v1899 = vld [vmem:[%s1897 + $0x8] sm:$0xff]
        %v1900 = vld [vmem:[%s1897 + $0x10] sm:$0xff]
        %v1901 = vld [vmem:[%s1897 + $0x18] sm:$0xff]
        %1903 = vset.pattern.permute.xlu0 0
        %1904 = vperm.xlu0 %1903, %v1898
        %v1905 = vpop.permute.xlu0 %1904
        %1908 = vset.pattern.permute.xlu0 0
        %1909 = vperm.xlu0 %1908, %v1899
        %v1910 = vpop.permute.xlu0 %1909
        %1913 = vset.pattern.permute.xlu0 0
        %1914 = vperm.xlu0 %1913, %v1900
        %v1915 = vpop.permute.xlu0 %1914
        %1918 = vset.pattern.permute.xlu0 0
        %1919 = vperm.xlu0 %1918, %v1901
        %v1920 = vpop.permute.xlu0 %1919
        %v1922 = vadd.f32 %v1889, %v1905
        %v1923 = vadd.f32 %v1890, %v1905
        %v1924 = vadd.f32 %v1891, %v1910
        %v1925 = vadd.f32 %v1892, %v1910
        %v1926 = vadd.f32 %v1893, %v1915
        %v1927 = vadd.f32 %v1894, %v1915
        %v1928 = vadd.f32 %v1895, %v1920
        %v1929 = vadd.f32 %v1896, %v1920
        %v1930 = vmax.f32 %v1922, 0.0
        %v1931 = vmax.f32 %v1923, 0.0
        %v1932 = vmax.f32 %v1924, 0.0
        %v1933 = vmax.f32 %v1925, 0.0
        %v1934 = vmax.f32 %v1926, 0.0
        %v1935 = vmax.f32 %v1927, 0.0
        %v1936 = vmax.f32 %v1928, 0.0
        %v1937 = vmax.f32 %v1929, 0.0
        %s1938 = scalar_lea.vmem %s9, 32
        %v1939 = vld [vmem:[%s1938] sm:$0xf]
        %v1940 = vld [vmem:[%s1938 + $0x4] sm:$0xf]
        %v1941 = vld [vmem:[%s1938 + $0x8] sm:$0xf]
        %v1942 = vld [vmem:[%s1938 + $0xc] sm:$0xf]
        %v1943 = vpack.c.bf16 %v1932, %v1930
        %v1944 = vpack.c.bf16 %v1933, %v1931
        %v1945 = vpack.c.bf16 %v1936, %v1934
        %v1946 = vpack.c.bf16 %v1937, %v1935
        %s1947 = scalar_lea.vmem %s10, 64
        %v1948 = vld [vmem:[%s1947] sm:$0xff]
        %v1949 = vld [vmem:[%s1947 + $0x8] sm:$0xff]
        %v1950 = vld [vmem:[%s1947 + $0x10] sm:$0xff]
        %v1951 = vld [vmem:[%s1947 + $0x18] sm:$0xff]
        %1953 = vset.pattern.permute.xlu0 0
        %1954 = vperm.xlu0 %1953, %v1948
        %v1955 = vpop.permute.xlu0 %1954
        %1958 = vset.pattern.permute.xlu0 0
        %1959 = vperm.xlu0 %1958, %v1949
        %v1960 = vpop.permute.xlu0 %1959
        %1963 = vset.pattern.permute.xlu0 0
        %1964 = vperm.xlu0 %1963, %v1950
        %v1965 = vpop.permute.xlu0 %1964
        %1968 = vset.pattern.permute.xlu0 0
        %1969 = vperm.xlu0 %1968, %v1951
        %v1970 = vpop.permute.xlu0 %1969
        %v1976 = vunpack.c.l.b16 %v1939
        %v1977 = vunpack.c.l.b16 %v1940
        %v1978 = vunpack.c.l.b16 %v1941
        %v1979 = vunpack.c.l.b16 %v1942
        %v1980 = vpack.c.b16 %v1977, %v1976
        %v1981 = vpack.c.b16 %v1979, %v1978
        %v1983 = vsel %vm756, %v1980, 0
        %v1986 = vsel %vm756, %v1981, 0
        %1988 = vmatprep.subr.bf16.mxu0 %v1944
        %1989 = vmatpush1.bf16.msra.mxu0 %v1943
        %1990 = vmatprep.subr.bf16.mxu0 %v1946
        %1991 = vmatpush1.bf16.msra.mxu0 %v1945
        %1992 = vmatprep.subr.bf16.mxu0 0
        %1993 = vmatpush1.bf16.msra.mxu0 0
        %1994 = vmatprep.subr.bf16.mxu0 0
        %1995 = vmatpush1.bf16.msra.mxu0 0
        %1996 = vmatprep.subr.bf16.mxu0 0
        %1997 = vmatpush1.bf16.msra.mxu0 0
        %1998 = vmatprep.subr.bf16.mxu0 0
        %1999 = vmatpush1.bf16.msra.mxu0 0
        %2000 = vmatprep.subr.bf16.mxu0 0
        %2001 = vmatpush1.bf16.msra.mxu0 0
        %2002 = vmatprep.subr.bf16.mxu0 0
        %2003 = vmatpush1.bf16.msra.mxu0 0
        %2004 = vmatprep.subr.bf16.mxu0 0
        %2005 = vmatpush1.bf16.msra.mxu0 0
        %2006 = vmatprep.subr.bf16.mxu0 0
        %2007 = vmatpush1.bf16.msra.mxu0 0
        %2008 = vmatprep.subr.bf16.mxu0 0
        %2009 = vmatpush1.bf16.msra.mxu0 0
        %2010 = vmatprep.subr.bf16.mxu0 0
        %2011 = vmatpush1.bf16.msra.mxu0 0
        %2012 = vmatprep.subr.bf16.mxu0 0
        %2013 = vmatpush1.bf16.msra.mxu0 0
        %2014 = vmatprep.subr.bf16.mxu0 0
        %2015 = vmatpush1.bf16.msra.mxu0 0
        %2016 = vmatprep.subr.bf16.mxu0 0
        %2017 = vmatpush1.bf16.msra.mxu0 0
        %2018 = vmatprep.subr.bf16.mxu0 0
        %2019 = vmatpush1.bf16.msra.mxu0 0
        %2020 = vmatprep.mubr.bf16.mxu0 0
        %2021 = vmatmul.mubr.bf16.gmra.mrb[0].mxu0 %v1983
        %v2022 = vpop.f32.mrb[0].mxu0
        %v2023 = vadd.f32 %v1955, %v2022
        %v2024 = vpop.f32.mrb[0].mxu0
        %v2025 = vadd.f32 %v1955, %v2024
        %v2026 = vpop.f32.mrb[0].mxu0
        %v2027 = vadd.f32 %v1960, %v2026
        %v2028 = vpop.f32.mrb[0].mxu0
        %v2029 = vadd.f32 %v1960, %v2028
        %2030 = vmatprep.mubr.bf16.mxu0 0
        %2031 = vmatmul.mubr.bf16.gmra.mrb[0].mxu0 %v1986
        %v2032 = vpop.f32.mrb[0].mxu0
        %v2033 = vadd.f32 %v1965, %v2032
        %v2034 = vpop.f32.mrb[0].mxu0
        %v2035 = vadd.f32 %v1965, %v2034
        %v2036 = vpop.f32.mrb[0].mxu0
        %v2037 = vadd.f32 %v1970, %v2036
        %v2038 = vpop.f32.mrb[0].mxu0
        %v2039 = vadd.f32 %v1970, %v2038
        %2040 = vdwg.mxu0
        %v2041 = vadd.f32 %v1595, %v2023
        %v2042 = vadd.f32 %v1596, %v2025
        %v2043 = vadd.f32 %v1597, %v2027
        %v2044 = vadd.f32 %v1598, %v2029
        %v2045 = vadd.f32 %v1599, %v2033
        %v2046 = vadd.f32 %v1600, %v2035
        %v2047 = vadd.f32 %v1601, %v2037
        %v2048 = vadd.f32 %v1602, %v2039
        %v2049 = vpack.c.bf16 %v2043, %v2041
        %v2050 = vpack.c.bf16 %v2044, %v2042
        %v2051 = vpack.c.bf16 %v2047, %v2045
        %v2052 = vpack.c.bf16 %v2048, %v2046
        %v2053 = vld [vmem:[%s11] sm:$0xf]
        %v2054 = vld [vmem:[%s12] sm:$0xff]
        %2056 = vset.pattern.permute.xlu0 0
        %2057 = vperm.xlu0 %2056, %v2054
        %v2058 = vpop.permute.xlu0 %2057
        %2064 = vrot.lane.b32.xlu0 %v2049, 121
        %v2065 = vpop.permute.xlu0 %2064
        %2066 = vrot.lane.b32.xlu0 %v2050, 121
        %v2067 = vpop.permute.xlu0 %2066
        %2068 = vrot.lane.b32.xlu0 %v2051, 121
        %v2069 = vpop.permute.xlu0 %2068
        %2070 = vrot.lane.b32.xlu0 %v2052, 121
        %v2071 = vpop.permute.xlu0 %2070
        %vm2072 = vcmask 990208
        %v2073 = vsel %vm2072, %v2065, %v2067
        %v2074 = vsel %vm2072, %v2069, %v2071
        %v2078 = vsel %vm756, %v2053, 0
        %2080 = vmatprep.subr.bf16.mxu0 0
        %2081 = vmatpush1.bf16.msra.mxu0 %v2073
        %2082 = vmatprep.subr.bf16.mxu0 0
        %2083 = vmatpush1.bf16.msra.mxu0 %v2074
        %2084 = vmatprep.subr.bf16.mxu0 0
        %2085 = vmatpush1.bf16.msra.mxu0 0
        %2086 = vmatprep.subr.bf16.mxu0 0
        %2087 = vmatpush1.bf16.msra.mxu0 0
        %2088 = vmatprep.subr.bf16.mxu0 0
        %2089 = vmatpush1.bf16.msra.mxu0 0
        %2090 = vmatprep.subr.bf16.mxu0 0
        %2091 = vmatpush1.bf16.msra.mxu0 0
        %2092 = vmatprep.subr.bf16.mxu0 0
        %2093 = vmatpush1.bf16.msra.mxu0 0
        %2094 = vmatprep.subr.bf16.mxu0 0
        %2095 = vmatpush1.bf16.msra.mxu0 0
        %2096 = vmatprep.subr.bf16.mxu0 0
        %2097 = vmatpush1.bf16.msra.mxu0 0
        %2098 = vmatprep.subr.bf16.mxu0 0
        %2099 = vmatpush1.bf16.msra.mxu0 0
        %2100 = vmatprep.subr.bf16.mxu0 0
        %2101 = vmatpush1.bf16.msra.mxu0 0
        %2102 = vmatprep.subr.bf16.mxu0 0
        %2103 = vmatpush1.bf16.msra.mxu0 0
        %2104 = vmatprep.subr.bf16.mxu0 0
        %2105 = vmatpush1.bf16.msra.mxu0 0
        %2106 = vmatprep.subr.bf16.mxu0 0
        %2107 = vmatpush1.bf16.msra.mxu0 0
        %2108 = vmatprep.subr.bf16.mxu0 0
        %2109 = vmatpush1.bf16.msra.mxu0 0
        %2110 = vmatprep.subr.bf16.mxu0 0
        %2111 = vmatpush1.bf16.msra.mxu0 0
        %2112 = vmatprep.mubr.bf16.mxu0 0
        %2113 = vmatmul.mubr.bf16.gmra.mrb[0].mxu0 %v2078
        %v2114 = vpop.f32.mrb[0].mxu0
        %v2115 = vadd.f32 %v2058, %v2114
        %v2116 = vpop.f32.mrb[0].mxu0
        %v2117 = vpop.f32.mrb[0].mxu0
        %v2118 = vpop.f32.mrb[0].mxu0
        %2119 = vdwg.mxu0
        %2120 = vst [vmem:[%s531] sm:$0xff] %v2115
        %s2121 = sand.u32 %s355, 1
        %s2122 = scalar_lea.sflag [#allocation4], %s2121
        %s2123 = sand.u32 %s355, 1
        %s2124 = smul.addr %s2123, 8
        %s2125 = scalar_lea.vmem [#allocation3], %s2124
        // Predicated region
        $region73: #{tpu_custom_call.1} parent=71 // pred_check
          %p2126 = pneg %p365
        $region74: #{tpu_custom_call.1} parent=71 // pred_check_branch
          %2128 = sbr.rel (%p2126) target = $region76
        $region75: #{tpu_custom_call.1} parent=71 // pred_region
          %s2130 = ssub.s32 128, 128
          %2131 = vsyncadd %s2122, %s2130
          %s2132 = smul.addr %s31, 2
          %s2133 = sadd.s32 %s32, %s2132
          %s2134 = smul.addr %s2133, 128
          %s2135 = scalar_lea.hbm %s13, %s2134
          %s2137 = sshll.u32 %s2125, 4
          %s2138 = int_to_ptr.vmem [resolvable:$true] %s2137
          %2140 = dma.vmem_to_hbm [thread:$0]  %s2138, 128, %s2135, %s2122
        $region76: #{tpu_custom_call.1} parent=71 // pred_fallthru
          _
      $region72: #{tpu_custom_call.1} parent=5 // pred_fallthru
        _
      %p2141 = scmp.le.s32.totalorder 2, %s22
      // Predicated region
      $region77: #{tpu_custom_call.1} parent=5 // pred_check
        %p2142 = pneg %p2141
      $region78: #{tpu_custom_call.1} parent=5 // pred_check_branch
        %2144 = sbr.rel (%p2142) target = $region80
      $region79: #{tpu_custom_call.1} parent=5 // pred_region
        %s2145 = ssub.s32 %s22, 2
        // Predicated region
        $region81: #{tpu_custom_call.1} parent=79 // pred_check
          %p2146 = pneg %p371
        $region82: #{tpu_custom_call.1} parent=79 // pred_check_branch
          %2148 = sbr.rel (%p2146) target = $region84
        $region83: #{tpu_custom_call.1} parent=79 // pred_region
          %s2149 = sand.u32 %s356, 1
          %s2150 = scalar_lea.sflag [#allocation4], %s2149
          %s2151 = sand.u32 %s356, 1
          %s2152 = smul.addr %s2151, 8
          %s2153 = scalar_lea.vmem [#allocation3], %s2152
          %2154 = dma.done %s2150, 128
        $region84: #{tpu_custom_call.1} parent=79 // pred_fallthru
          _
      $region80: #{tpu_custom_call.1} parent=5 // pred_fallthru
        _
    $region6: #{tpu_custom_call.1} parent=1 // loop_footer
      %s26 = sadd.s32 1, %s22
    $region7: #{tpu_custom_call.1} parent=1 // loop_footer_branch
      %21 = sbr.rel target = $region3
    $region8: #{tpu_custom_call.1} parent=1 // loop_exit
      _
    %2155 = vsyncpa [#allocation4], 1
    %s2156 = scalar_lea.sflag [#allocation4], 1
    %2157 = vsyncpa %s2156, 1

</llo_original>
